<compile_context>
chip_gen: v7x
topology: tpu7x:2x2x1
jax: 0.10.0
libtpu: 0.0.40
codegen_flags: <defaults>
</compile_context>

<pallas_src>
import math
import numpy as np

import jax
import jax.numpy as jnp
from jax.experimental import pallas as pl
from jax.experimental.pallas import tpu as pltpu

# ---- static hyper-parameters (stand-ins for the `params` Namespace) ----
N = 16                      # number of nodes per graph-batch
E = 32                      # number of edges per graph-batch
G = 2                       # num_graphs per graph-batch
H = 16                      # hidden_irreps = "16x0e" (scalar hidden features)
LMAX = 2
S_DIM = (LMAX + 1) ** 2     # edge spherical-harmonics dim = 9
NUM_EDGE_BASES = 4
F_DIM = 2 * NUM_EDGE_BASES  # edge_feats dim = 8
MLP_DIM = 16                # inter_MLP_dim
NUM_LAYERS = 2              # message_passes
R_DIM = 21                  # readout_irreps = "2x0e + 2x2e + 1x4e"
AGG_NORM = 10.0             # agg_norm_const

FS = F_DIM + S_DIM                       # 17  (edge_feats | edge_sh)
HCOLS = NUM_LAYERS * MLP_DIM             # 32  h-pre columns of the fused edge matmul
GCOLS = NUM_LAYERS * H                   # 32  sh-mod columns
EDGE_COLS = HCOLS + GCOLS                # 64
W_COLS = 64


def _align8(r):
    return ((r + 7) // 8) * 8


# Row offsets of the single packed-weight buffer (all 8-aligned -> clean
# sublane slices inside the kernel).
OFF_EDGE = 0                                           # (17, 64) fused edge/SH weights
OFF_W2 = _align8(OFF_EDGE + FS)                        # 24  (32, 32) blockdiag(w2_0, w2_1)
OFF_UPD = _align8(OFF_W2 + HCOLS)                      # 56  (L*32, 16) [wself/AGG ; wskip] per layer
OFF_WR1 = _align8(OFF_UPD + NUM_LAYERS * 2 * H)        # 120 (16, 16) readout hidden
OFF_TAIL = _align8(OFF_WR1 + H)                        # 136 (16, 36) composed readout tail
OFF_BT = _align8(OFF_TAIL + H)                         # 152 (1, 36)  composed bias
W_ROWS = _align8(OFF_BT + 1)                           # 160


# ------------------------------ kernel ----------------------------------
def _gnn_head_kernel(node_ref, edge_ref, esrc_ref, edst_ref, bidx_ref,
                     w_ref, out_ref):
    f32, bf16 = jnp.float32, jnp.bfloat16

    x0 = node_ref[...]                          # (N, H)   f32
    edge_in = edge_ref[...].astype(bf16)        # (E, FS)
    esrc = esrc_ref[...]                        # (E, 1)   int32
    edst = edst_ref[...]                        # (1, E)   int32
    bidx = bidx_ref[...]                        # (1, N)   int32

    # Resident fused weights (constant index_map -> DMA'd once per call).
    w_edge_all = w_ref[OFF_EDGE:OFF_EDGE + FS, 0:EDGE_COLS].astype(bf16)   # (17, 64)
    w2_blk = w_ref[OFF_W2:OFF_W2 + HCOLS, 0:GCOLS].astype(bf16)            # (32, 32)
    wr1 = w_ref[OFF_WR1:OFF_WR1 + H, 0:H]                                  # (16, 16) f32
    w_tail = w_ref[OFF_TAIL:OFF_TAIL + H, 0:36]                            # (16, 36) f32
    b_tail = w_ref[OFF_BT:OFF_BT + 1, 0:36]                                # (1, 36)  f32

    # ---- x-independent edge compute: hoisted out of the layer loop and
    # fused across layers into two matmuls (review item 1) ----
    ew = jnp.dot(edge_in, w_edge_all, preferred_element_type=f32)          # (E, 64)
    h_all = jax.nn.silu(ew[:, 0:HCOLS])                                    # (E, 32) f32
    we_all = jnp.dot(h_all.astype(bf16), w2_blk,
                     preferred_element_type=f32)                           # (E, 32)
    gates = we_all * ew[:, HCOLS:]                                         # (E, 32) f32, [gate_0 | gate_1]

    # ---- one-hot gather/scatter/pool operands built in-kernel (VPU) ----
    iota_en = jax.lax.broadcasted_iota(jnp.int32, (E, N), 1)
    src_oh = jnp.where(iota_en == esrc, 1.0, 0.0).astype(bf16)             # (E, N)
    iota_ne = jax.lax.broadcasted_iota(jnp.int32, (N, E), 0)
    dst_ohT = jnp.where(iota_ne == edst, 1.0, 0.0).astype(bf16)            # (N, E)
    iota_gn = jax.lax.broadcasted_iota(jnp.int32, (G, N), 0)
    pool_oh = jnp.where(iota_gn == bidx, 1.0, 0.0)                         # (G, N) f32 (exact)

    def mace_layer(x, l):
        # TODO(synk): the full e3nn tensor product + symmetric contraction
        # (correlation) inside MACELayer has no clean Pallas equivalent;
        # approximated by an edge-MLP-gated, SH-modulated message +
        # linear self/skip update with SiLU.
        x_src = jnp.dot(src_oh, x.astype(bf16),
                        preferred_element_type=f32)                        # (E, H)
        msg = x_src * gates[:, l * H:(l + 1) * H]                          # f32 VPU
        agg = jnp.dot(dst_ohT, msg.astype(bf16),
                      preferred_element_type=f32)                          # (N, H)
        # Fused self/skip update: [agg | x] @ [wself/AGG_NORM ; wskip].
        ax = jnp.concatenate([agg, x], axis=-1).astype(bf16)               # (N, 2H)
        w_upd = w_ref[OFF_UPD + l * 2 * H:OFF_UPD + (l + 1) * 2 * H,
                      0:H].astype(bf16)                                    # (2H, H)
        return jax.nn.silu(jnp.dot(ax, w_upd, preferred_element_type=f32))  # (N, H)

    # layer 0 (non-residual, as in the reference), then residual layers
    x = mace_layer(x0, 0)
    for l in range(1, NUM_LAYERS):
        x = x + mace_layer(x, l)

    # Readout kept in f32 (tiny matmuls; avoids bf16 error before the square).
    hid = jax.nn.silu(jnp.dot(x, wr1, preferred_element_type=f32))          # (N, H)
    out36 = jnp.dot(hid, w_tail, preferred_element_type=f32) + b_tail       # (N, 36)

    # Exact "mean" pooling: f32 one-hot sum, then f32 1/count scale.
    pooled = jnp.dot(pool_oh, out36, preferred_element_type=f32)            # (G, 36)
    counts = jnp.sum(pool_oh, axis=1, keepdims=True)                        # (G, 1)
    mand = pooled / jnp.maximum(counts, 1.0)                                 # (G, 36)

    # C_pos = matrix_power(C, 2) per graph, on the VPU (outer-product sum),
    # stored lane-dense as (G, 36).
    C = jnp.reshape(mand, (G, 6, 6))
    acc = C[:, :, 0:1] * C[:, 0:1, :]
    for k in range(1, 6):
        acc = acc + C[:, :, k:k + 1] * C[:, k:k + 1, :]
    out_ref[...] = jnp.reshape(acc, (G, 36))


# ------------------------- host-side fusion / glue -----------------------
def _pack_weights(w1, w2, wsh, wself, wskip, wr1, wr2, wlin, blin,
                  sph2cart, cart2mandel):
    """Pre-compose / stack all weights into ONE f32 (W_ROWS, W_COLS) buffer."""
    w1 = np.asarray(w1, np.float32)
    w2 = np.asarray(w2, np.float32)
    wsh = np.asarray(wsh, np.float32)
    wself = np.asarray(wself, np.float32)
    wskip = np.asarray(wskip, np.float32)
    wr1 = np.asarray(wr1, np.float32)
    # Composed constant readout tail: wr2 @ o3.Linear @ sph_to_cart @ Mandel.
    w_tail = (np.asarray(wr2, np.float32) @ np.asarray(wlin, np.float32)
              @ np.asarray(sph2cart, np.float32) @ np.asarray(cart2mandel, np.float32))
    b_tail = (np.asarray(blin, np.float32) @ np.asarray(sph2cart, np.float32)
              @ np.asarray(cart2mandel, np.float32))

    pack = np.zeros((W_ROWS, W_COLS), np.float32)
    for l in range(NUM_LAYERS):
        # Fused edge matmul: [edge_feats | edge_sh] -> [h_0|h_1|sh_0|sh_1].
        pack[OFF_EDGE:OFF_EDGE + F_DIM, l * MLP_DIM:(l + 1) * MLP_DIM] = w1[l]
        pack[OFF_EDGE + F_DIM:OFF_EDGE + FS,
             HCOLS + l * H:HCOLS + (l + 1) * H] = wsh[l]
        # Block-diag second edge-MLP layer across layers.
        pack[OFF_W2 + l * MLP_DIM:OFF_W2 + (l + 1) * MLP_DIM,
             l * H:(l + 1) * H] = w2[l]
        # Fused self/skip update, 1/AGG_NORM folded into the self path.
        pack[OFF_UPD + l * 2 * H:OFF_UPD + l * 2 * H + H, 0:H] = wself[l] / AGG_NORM
        pack[OFF_UPD + l * 2 * H + H:OFF_UPD + (l + 1) * 2 * H, 0:H] = wskip[l]
    pack[OFF_WR1:OFF_WR1 + H, 0:H] = wr1
    pack[OFF_TAIL:OFF_TAIL + H, 0:36] = w_tail
    pack[OFF_BT, 0:36] = b_tail[0]
    return jnp.asarray(pack)


def gnn_head_forward(edge_index, node_ft, edge_sh, edge_feats, batch_idx,
                     num_graphs, w_pack):
    """Batched forward: leading dim B = graph-batches processed per call."""
    assert num_graphs == G
    B = node_ft.shape[0]
    edge_in = jnp.concatenate([edge_feats, edge_sh], axis=-1)      # (B, E, FS) f32
    esrc = edge_index[:, 0, :, None].astype(jnp.int32)             # (B, E, 1)
    edst = edge_index[:, 1:2, :].astype(jnp.int32)                 # (B, 1, E)
    bnd = batch_idx[:, None, :].astype(jnp.int32)                  # (B, 1, N)

    out = pl.pallas_call(
        _gnn_head_kernel,
        out_shape=jax.ShapeDtypeStruct((B, num_graphs, 36), jnp.float32),
        grid=(B,),
        in_specs=[
            pl.BlockSpec((None, N, H), lambda b: (b, 0, 0)),
            pl.BlockSpec((None, E, FS), lambda b: (b, 0, 0)),
            pl.BlockSpec((None, E, 1), lambda b: (b, 0, 0)),
            pl.BlockSpec((None, 1, E), lambda b: (b, 0, 0)),
            pl.BlockSpec((None, 1, N), lambda b: (b, 0, 0)),
            # Weights: constant index_map -> stay resident across the grid.
            pl.BlockSpec((W_ROWS, W_COLS), lambda b: (0, 0)),
        ],
        out_specs=pl.BlockSpec((None, num_graphs, 36), lambda b: (b, 0, 0)),
        compiler_params=pltpu.CompilerParams(
            dimension_semantics=("parallel",)),
    )(node_ft, edge_in, esrc, edst, bnd, w_pack)
    # Lane-dense (B, G, 36) in the kernel; 6x6 reshape is free on the host.
    return out.reshape(B, num_graphs, 6, 6)


# ------------------------- parameter / matrix setup ----------------------
def _build_sph_to_cart_and_mandel():
    # TODO(synk): exact e3nn harmonic change-of-basis of Spherical_to_Cartesian
    # is not reproduced; a deterministic symmetric-fill basis over the 21-dim
    # space of elasticity tensors (full minor+major symmetry) is used instead.
    sqrt2 = math.sqrt(2.0)
    voigt = {(0, 0): 0, (1, 1): 1, (2, 2): 2,
             (1, 2): 3, (2, 1): 3, (0, 2): 4, (2, 0): 4, (0, 1): 5, (1, 0): 5}
    pairs_rep = [(0, 0), (1, 1), (2, 2), (1, 2), (0, 2), (0, 1)]
    factors = [1.0, 1.0, 1.0, sqrt2, sqrt2, sqrt2]
    tri_pairs = [(a, b) for a in range(6) for b in range(a, 6)]  # 21

    B_ = np.zeros((21, 81), dtype=np.float32)    # sph (21) -> cart (3,3,3,3) flat
    for p, (a, b) in enumerate(tri_pairs):
        for i in range(3):
            for j in range(3):
                for k in range(3):
                    for l in range(3):
                        va, vb = voigt[(i, j)], voigt[(k, l)]
                        if tuple(sorted((va, vb))) == (a, b):
                            B_[p, 27 * i + 9 * j + 3 * k + l] = 1.0

    M = np.zeros((81, 36), dtype=np.float32)     # cart flat -> Mandel 6x6 flat
    for a in range(6):
        for b in range(6):
            i, j = pairs_rep[a]
            k, l = pairs_rep[b]
            M[27 * i + 9 * j + 3 * k + l, 6 * a + b] = factors[a] * factors[b]
    return jnp.asarray(B_), jnp.asarray(M)


def _build_o3_linear(key):
    # readout_irreps = 2x0e + 2x2e + 1x4e  ->  2x0e + 2x2e + 1x4e, biases on 0e
    k0, k2, k4, kb = jax.random.split(key, 4)
    W0 = np.asarray(jax.random.normal(k0, (2, 2)), dtype=np.float32) * 0.5
    W2 = np.asarray(jax.random.normal(k2, (2, 2)), dtype=np.float32) * 0.5
    W4 = float(np.asarray(jax.random.normal(k4, ())) * 0.5)
    b0 = np.asarray(jax.random.normal(kb, (2,)), dtype=np.float32) * 0.1

    Wlin = np.zeros((R_DIM, R_DIM), dtype=np.float32)
    Wlin[0:2, 0:2] = W0 / math.sqrt(2.0)                       # 0e block
    for ci in range(2):                                        # 2e block
        for co in range(2):
            for m in range(5):
                Wlin[2 + 5 * ci + m, 2 + 5 * co + m] = W2[ci, co] / math.sqrt(2.0)
    for m in range(9):                                         # 4e block
        Wlin[12 + m, 12 + m] = W4
    blin = np.zeros((1, R_DIM), dtype=np.float32)
    blin[0, 0:2] = b0
    return jnp.asarray(Wlin), jnp.asarray(blin)


# --------------------------- pure-JAX f32 reference -----------------------
def _reference_forward(node_ft, edge_sh, edge_feats, edge_index, batch_idx,
                       num_graphs, raw):
    (w1, w2, wsh, wself, wskip, wr1, wr2, wlin, blin, s2c, c2m) = raw
    w_tail = wr2 @ wlin @ s2c @ c2m
    b_tail = blin @ s2c @ c2m

    def one(b):
        x = node_ft[b]
        src, dst = edge_index[b, 0], edge_index[b, 1]

        def layer(x, l):
            h = jax.nn.silu(edge_feats[b] @ w1[l])
            gate = (h @ w2[l]) * (edge_sh[b] @ wsh[l])
            msg = x[src] * gate
            agg = jax.ops.segment_sum(msg, dst, num_segments=N) / AGG_NORM
            return jax.nn.silu(agg @ wself[l] + x @ wskip[l])

        x = layer(x, 0)
        for l in range(1, NUM_LAYERS):
            x = x + layer(x, l)
        hid = jax.nn.silu(x @ wr1)
        out = hid @ w_tail + b_tail                                  # (N, 36)
        pool = (jnp.arange(num_graphs)[:, None]
                == batch_idx[b][None, :]).astype(jnp.float32)        # (G, N)
        cnt = jnp.clip(jnp.sum(pool, axis=1, keepdims=True), 1.0, None)
        C = ((pool @ out) / cnt).reshape(num_graphs, 6, 6)
        return jnp.einsum('gik,gkj->gij', C, C)

    return jnp.stack([one(b) for b in range(node_ft.shape[0])])


# --------------------------------- main -----------------------------------
if __name__ == "__main__":
    key = jax.random.PRNGKey(0)
    ks = jax.random.split(key, 16)
    B = 4   # graph-batches per kernel call (grid axis, "parallel")

    # forward() inputs (batched with a leading B axis)
    node_ft = jax.random.normal(ks[0], (B, N, H), dtype=jnp.float32)
    edge_sh = jax.random.normal(ks[1], (B, E, S_DIM), dtype=jnp.float32)
    edge_feats = jax.random.normal(ks[2], (B, E, F_DIM), dtype=jnp.float32)
    edge_index = jnp.stack([
        jax.random.randint(ks[3], (B, E), 0, N),
        jax.random.randint(ks[4], (B, E), 0, N)], axis=1).astype(jnp.int32)   # (B, 2, E)
    batch_idx = jnp.broadcast_to(
        jnp.concatenate([jnp.zeros((N // 2,), jnp.int32),
                         jnp.ones((N - N // 2,), jnp.int32)]), (B, N))

    # deterministic raw parameters (as in the PyTorch module)
    s = 0.3
    w1 = jax.random.normal(ks[5], (NUM_LAYERS, F_DIM, MLP_DIM), dtype=jnp.float32) * s
    w2 = jax.random.normal(ks[6], (NUM_LAYERS, MLP_DIM, H), dtype=jnp.float32) * s
    wsh = jax.random.normal(ks[7], (NUM_LAYERS, S_DIM, H), dtype=jnp.float32) * s
    wself = jax.random.normal(ks[8], (NUM_LAYERS, H, H), dtype=jnp.float32) * s
    wskip = jax.random.normal(ks[9], (NUM_LAYERS, H, H), dtype=jnp.float32) * s
    wr1 = jax.random.normal(ks[10], (H, H), dtype=jnp.float32) * s
    wr2 = jax.random.normal(ks[11], (H, R_DIM), dtype=jnp.float32) * s
    wlin, blin = _build_o3_linear(ks[12])
    s2c, c2m = _build_sph_to_cart_and_mandel()

    # host-side weight fusion / single packed buffer (done once)
    w_pack = _pack_weights(w1, w2, wsh, wself, wskip, wr1, wr2,
                           wlin, blin, s2c, c2m)

    C_pos = gnn_head_forward(edge_index, node_ft, edge_sh, edge_feats,
                             batch_idx, G, w_pack)
    C_pos = jax.block_until_ready(C_pos)

    # f32 reference check (bf16 only on the layer-path MXU operands)
    ref = _reference_forward(node_ft, edge_sh, edge_feats, edge_index,
                             batch_idx, G,
                             (w1, w2, wsh, wself, wskip, wr1, wr2,
                              wlin, blin, s2c, c2m))
    err = float(jnp.max(jnp.abs(C_pos - ref)))
    scale = float(jnp.max(jnp.abs(ref)))

    assert C_pos.shape == (B, G, 6, 6) and C_pos.dtype == jnp.float32
    assert bool(jnp.all(jnp.isfinite(C_pos)))
    assert err <= 0.1 * scale + 1e-3, (err, scale)
    print("KERNEL_OK")
</pallas_src>

<mosaic_0001>
module attributes {stable_mosaic.version = 11 : i64} {
  func.func @_gnn_head_kernel(%arg0: i32, %arg1: memref<1x16x16xf32, #tpu.memory_space<vmem>>, %arg2: memref<1x32x17xf32, #tpu.memory_space<vmem>>, %arg3: memref<1x32x1xi32, #tpu.memory_space<vmem>>, %arg4: memref<1x1x32xi32, #tpu.memory_space<vmem>>, %arg5: memref<1x1x16xi32, #tpu.memory_space<vmem>>, %arg6: memref<160x64xf32, #tpu.memory_space<vmem>>, %arg7: memref<1x2x36xf32, #tpu.memory_space<vmem>>) attributes {dimension_semantics = [#tpu.dimension_semantics<parallel>], iteration_bounds = array<i64: 4>, scalar_prefetch = 0 : i64, scratch_operands = 0 : i64, tpu.core_type = #tpu.core_type<tc>, window_params = [{transform_indices = @transform_0, window_bounds = array<i64: 1, 16, 16>}, {transform_indices = @transform_1, window_bounds = array<i64: 1, 32, 17>}, {transform_indices = @transform_2, window_bounds = array<i64: 1, 32, 1>}, {transform_indices = @transform_3, window_bounds = array<i64: 1, 1, 32>}, {transform_indices = @transform_4, window_bounds = array<i64: 1, 1, 16>}, {pipeline_mode = #tpu.pipeline_mode<synchronous>, transform_indices = @transform_5, window_bounds = array<i64: 160, 64>}, {transform_indices = @transform_6, window_bounds = array<i64: 1, 2, 36>}]} {
    %c0 = arith.constant 0 : index
    %c0_0 = arith.constant 0 : index
    %c0_1 = arith.constant 0 : index
    %0 = vector.load %arg1[%c0, %c0_0, %c0_1] : memref<1x16x16xf32, #tpu.memory_space<vmem>>, vector<1x16x16xf32>
    %1 = vector.shape_cast %0 : vector<1x16x16xf32> to vector<16x16xf32>
    %c0_2 = arith.constant 0 : index
    %c0_3 = arith.constant 0 : index
    %c0_4 = arith.constant 0 : index
    %2 = vector.load %arg2[%c0_2, %c0_3, %c0_4] : memref<1x32x17xf32, #tpu.memory_space<vmem>>, vector<1x32x17xf32>
    %3 = vector.shape_cast %2 : vector<1x32x17xf32> to vector<32x17xf32>
    %4 = arith.truncf %3 : vector<32x17xf32> to vector<32x17xbf16>
    %c0_5 = arith.constant 0 : index
    %c0_6 = arith.constant 0 : index
    %c0_7 = arith.constant 0 : index
    %5 = vector.load %arg3[%c0_5, %c0_6, %c0_7] : memref<1x32x1xi32, #tpu.memory_space<vmem>>, vector<1x32x1xi32>
    %6 = vector.shape_cast %5 : vector<1x32x1xi32> to vector<32x1xi32>
    %c0_8 = arith.constant 0 : index
    %c0_9 = arith.constant 0 : index
    %c0_10 = arith.constant 0 : index
    %7 = vector.load %arg4[%c0_8, %c0_9, %c0_10] : memref<1x1x32xi32, #tpu.memory_space<vmem>>, vector<1x1x32xi32>
    %8 = vector.shape_cast %7 : vector<1x1x32xi32> to vector<1x32xi32>
    %c0_11 = arith.constant 0 : index
    %c0_12 = arith.constant 0 : index
    %c0_13 = arith.constant 0 : index
    %9 = vector.load %arg5[%c0_11, %c0_12, %c0_13] : memref<1x1x16xi32, #tpu.memory_space<vmem>>, vector<1x1x16xi32>
    %10 = vector.shape_cast %9 : vector<1x1x16xi32> to vector<1x16xi32>
    %c0_14 = arith.constant 0 : index
    %c0_15 = arith.constant 0 : index
    %11 = vector.load %arg6[%c0_14, %c0_15] : memref<160x64xf32, #tpu.memory_space<vmem>>, vector<17x64xf32>
    %12 = arith.truncf %11 : vector<17x64xf32> to vector<17x64xbf16>
    %c24 = arith.constant 24 : index
    %c0_16 = arith.constant 0 : index
    %13 = vector.load %arg6[%c24, %c0_16] : memref<160x64xf32, #tpu.memory_space<vmem>>, vector<32x32xf32>
    %14 = arith.truncf %13 : vector<32x32xf32> to vector<32x32xbf16>
    %c120 = arith.constant 120 : index
    %c0_17 = arith.constant 0 : index
    %15 = vector.load %arg6[%c120, %c0_17] : memref<160x64xf32, #tpu.memory_space<vmem>>, vector<16x16xf32>
    %c136 = arith.constant 136 : index
    %c0_18 = arith.constant 0 : index
    %16 = vector.load %arg6[%c136, %c0_18] : memref<160x64xf32, #tpu.memory_space<vmem>>, vector<16x36xf32>
    %c152 = arith.constant 152 : index
    %c0_19 = arith.constant 0 : index
    %17 = vector.load %arg6[%c152, %c0_19] : memref<160x64xf32, #tpu.memory_space<vmem>>, vector<1x36xf32>
    %cst = arith.constant dense<0.000000e+00> : vector<32x64xf32>
    %18 = tpu.matmul %4, %12, %cst {dimension_numbers = #tpu.dot_dimension_numbers<[1], [0], [0], [1], [0, 0, 1, 1], [], []>} : vector<32x17xbf16>, vector<17x64xbf16>, vector<32x64xf32> -> vector<32x64xf32>
    %19 = vector.extract_strided_slice %18 {offsets = [0, 0], sizes = [32, 32], strides = [1, 1]} : vector<32x64xf32> to vector<32x32xf32>
    %20 = arith.negf %19 : vector<32x32xf32>
    %21 = math.exp %20 : vector<32x32xf32>
    %cst_20 = arith.constant 1.000000e+00 : f32
    %22 = vector.broadcast %cst_20 : f32 to vector<32x32xf32>
    %23 = arith.addf %22, %21 : vector<32x32xf32>
    %24 = arith.divf %22, %23 : vector<32x32xf32>
    %25 = arith.mulf %19, %24 : vector<32x32xf32>
    %26 = arith.truncf %25 : vector<32x32xf32> to vector<32x32xbf16>
    %cst_21 = arith.constant dense<0.000000e+00> : vector<32x32xf32>
    %27 = tpu.matmul %26, %14, %cst_21 {dimension_numbers = #tpu.dot_dimension_numbers<[1], [0], [0], [1], [0, 0, 1, 1], [], []>} : vector<32x32xbf16>, vector<32x32xbf16>, vector<32x32xf32> -> vector<32x32xf32>
    %28 = vector.extract_strided_slice %18 {offsets = [0, 32], sizes = [32, 32], strides = [1, 1]} : vector<32x64xf32> to vector<32x32xf32>
    %29 = arith.mulf %27, %28 : vector<32x32xf32>
    %30 = tpu.iota {dimensions = array<i32: 1>} : vector<32x16xi32>
    %31 = vector.broadcast %6 : vector<32x1xi32> to vector<32x16xi32>
    %32 = arith.cmpi eq, %30, %31 : vector<32x16xi32>
    %cst_22 = arith.constant 1.000000e+00 : f32
    %cst_23 = arith.constant 0.000000e+00 : f32
    %33 = vector.broadcast %cst_22 : f32 to vector<32x16xf32>
    %34 = vector.broadcast %cst_23 : f32 to vector<32x16xf32>
    %35 = arith.select %32, %33, %34 : vector<32x16xi1>, vector<32x16xf32>
    %36 = arith.truncf %35 : vector<32x16xf32> to vector<32x16xbf16>
    %37 = tpu.iota {dimensions = array<i32: 0>} : vector<16x32xi32>
    %38 = vector.broadcast %8 : vector<1x32xi32> to vector<16x32xi32>
    %39 = arith.cmpi eq, %37, %38 : vector<16x32xi32>
    %cst_24 = arith.constant 1.000000e+00 : f32
    %cst_25 = arith.constant 0.000000e+00 : f32
    %40 = vector.broadcast %cst_24 : f32 to vector<16x32xf32>
    %41 = vector.broadcast %cst_25 : f32 to vector<16x32xf32>
    %42 = arith.select %39, %40, %41 : vector<16x32xi1>, vector<16x32xf32>
    %43 = arith.truncf %42 : vector<16x32xf32> to vector<16x32xbf16>
    %44 = tpu.iota {dimensions = array<i32: 0>} : vector<2x16xi32>
    %45 = vector.broadcast %10 : vector<1x16xi32> to vector<2x16xi32>
    %46 = arith.cmpi eq, %44, %45 : vector<2x16xi32>
    %cst_26 = arith.constant 1.000000e+00 : f32
    %cst_27 = arith.constant 0.000000e+00 : f32
    %47 = vector.broadcast %cst_26 : f32 to vector<2x16xf32>
    %48 = vector.broadcast %cst_27 : f32 to vector<2x16xf32>
    %49 = arith.select %46, %47, %48 : vector<2x16xi1>, vector<2x16xf32>
    %50 = arith.truncf %1 : vector<16x16xf32> to vector<16x16xbf16>
    %cst_28 = arith.constant dense<0.000000e+00> : vector<32x16xf32>
    %51 = tpu.matmul %36, %50, %cst_28 {dimension_numbers = #tpu.dot_dimension_numbers<[1], [0], [0], [1], [0, 0, 1, 1], [], []>} : vector<32x16xbf16>, vector<16x16xbf16>, vector<32x16xf32> -> vector<32x16xf32>
    %52 = vector.extract_strided_slice %29 {offsets = [0, 0], sizes = [32, 16], strides = [1, 1]} : vector<32x32xf32> to vector<32x16xf32>
    %53 = arith.mulf %51, %52 : vector<32x16xf32>
    %54 = arith.truncf %53 : vector<32x16xf32> to vector<32x16xbf16>
    %cst_29 = arith.constant dense<0.000000e+00> : vector<16x16xf32>
    %55 = tpu.matmul %43, %54, %cst_29 {dimension_numbers = #tpu.dot_dimension_numbers<[1], [0], [0], [1], [0, 0, 1, 1], [], []>} : vector<16x32xbf16>, vector<32x16xbf16>, vector<16x16xf32> -> vector<16x16xf32>
    %56 = tpu.concatenate %55, %1 in 1 : vector<16x16xf32>, vector<16x16xf32> -> vector<16x32xf32>
    %57 = arith.truncf %56 : vector<16x32xf32> to vector<16x32xbf16>
    %c56 = arith.constant 56 : index
    %c0_30 = arith.constant 0 : index
    %58 = vector.load %arg6[%c56, %c0_30] : memref<160x64xf32, #tpu.memory_space<vmem>>, vector<32x16xf32>
    %59 = arith.truncf %58 : vector<32x16xf32> to vector<32x16xbf16>
    %cst_31 = arith.constant dense<0.000000e+00> : vector<16x16xf32>
    %60 = tpu.matmul %57, %59, %cst_31 {dimension_numbers = #tpu.dot_dimension_numbers<[1], [0], [0], [1], [0, 0, 1, 1], [], []>} : vector<16x32xbf16>, vector<32x16xbf16>, vector<16x16xf32> -> vector<16x16xf32>
    %61 = arith.negf %60 : vector<16x16xf32>
    %62 = math.exp %61 : vector<16x16xf32>
    %cst_32 = arith.constant 1.000000e+00 : f32
    %63 = vector.broadcast %cst_32 : f32 to vector<16x16xf32>
    %64 = arith.addf %63, %62 : vector<16x16xf32>
    %65 = arith.divf %63, %64 : vector<16x16xf32>
    %66 = arith.mulf %60, %65 : vector<16x16xf32>
    %67 = arith.truncf %66 : vector<16x16xf32> to vector<16x16xbf16>
    %cst_33 = arith.constant dense<0.000000e+00> : vector<32x16xf32>
    %68 = tpu.matmul %36, %67, %cst_33 {dimension_numbers = #tpu.dot_dimension_numbers<[1], [0], [0], [1], [0, 0, 1, 1], [], []>} : vector<32x16xbf16>, vector<16x16xbf16>, vector<32x16xf32> -> vector<32x16xf32>
    %69 = vector.extract_strided_slice %29 {offsets = [0, 16], sizes = [32, 16], strides = [1, 1]} : vector<32x32xf32> to vector<32x16xf32>
    %70 = arith.mulf %68, %69 : vector<32x16xf32>
    %71 = arith.truncf %70 : vector<32x16xf32> to vector<32x16xbf16>
    %cst_34 = arith.constant dense<0.000000e+00> : vector<16x16xf32>
    %72 = tpu.matmul %43, %71, %cst_34 {dimension_numbers = #tpu.dot_dimension_numbers<[1], [0], [0], [1], [0, 0, 1, 1], [], []>} : vector<16x32xbf16>, vector<32x16xbf16>, vector<16x16xf32> -> vector<16x16xf32>
    %73 = tpu.concatenate %72, %66 in 1 : vector<16x16xf32>, vector<16x16xf32> -> vector<16x32xf32>
    %74 = arith.truncf %73 : vector<16x32xf32> to vector<16x32xbf16>
    %c88 = arith.constant 88 : index
    %c0_35 = arith.constant 0 : index
    %75 = vector.load %arg6[%c88, %c0_35] : memref<160x64xf32, #tpu.memory_space<vmem>>, vector<32x16xf32>
    %76 = arith.truncf %75 : vector<32x16xf32> to vector<32x16xbf16>
    %cst_36 = arith.constant dense<0.000000e+00> : vector<16x16xf32>
    %77 = tpu.matmul %74, %76, %cst_36 {dimension_numbers = #tpu.dot_dimension_numbers<[1], [0], [0], [1], [0, 0, 1, 1], [], []>} : vector<16x32xbf16>, vector<32x16xbf16>, vector<16x16xf32> -> vector<16x16xf32>
    %78 = arith.negf %77 : vector<16x16xf32>
    %79 = math.exp %78 : vector<16x16xf32>
    %cst_37 = arith.constant 1.000000e+00 : f32
    %80 = vector.broadcast %cst_37 : f32 to vector<16x16xf32>
    %81 = arith.addf %80, %79 : vector<16x16xf32>
    %82 = arith.divf %80, %81 : vector<16x16xf32>
    %83 = arith.mulf %77, %82 : vector<16x16xf32>
    %84 = arith.addf %66, %83 : vector<16x16xf32>
    %cst_38 = arith.constant dense<0.000000e+00> : vector<16x16xf32>
    %85 = tpu.matmul %84, %15, %cst_38 {dimension_numbers = #tpu.dot_dimension_numbers<[1], [0], [0], [1], [0, 0, 1, 1], [], []>} : vector<16x16xf32>, vector<16x16xf32>, vector<16x16xf32> -> vector<16x16xf32>
    %86 = arith.negf %85 : vector<16x16xf32>
    %87 = math.exp %86 : vector<16x16xf32>
    %cst_39 = arith.constant 1.000000e+00 : f32
    %88 = vector.broadcast %cst_39 : f32 to vector<16x16xf32>
    %89 = arith.addf %88, %87 : vector<16x16xf32>
    %90 = arith.divf %88, %89 : vector<16x16xf32>
    %91 = arith.mulf %85, %90 : vector<16x16xf32>
    %cst_40 = arith.constant dense<0.000000e+00> : vector<16x36xf32>
    %92 = tpu.matmul %91, %16, %cst_40 {dimension_numbers = #tpu.dot_dimension_numbers<[1], [0], [0], [1], [0, 0, 1, 1], [], []>} : vector<16x16xf32>, vector<16x36xf32>, vector<16x36xf32> -> vector<16x36xf32>
    %93 = vector.broadcast %17 : vector<1x36xf32> to vector<16x36xf32>
    %94 = arith.addf %92, %93 : vector<16x36xf32>
    %cst_41 = arith.constant dense<0.000000e+00> : vector<2x36xf32>
    %95 = tpu.matmul %49, %94, %cst_41 {dimension_numbers = #tpu.dot_dimension_numbers<[1], [0], [0], [1], [0, 0, 1, 1], [], []>} : vector<2x16xf32>, vector<16x36xf32>, vector<2x36xf32> -> vector<2x36xf32>
    %cst_42 = arith.constant dense<0.000000e+00> : vector<2xf32>
    %96 = vector.multi_reduction <add>, %49, %cst_42 [1] : vector<2x16xf32> to vector<2xf32>
    %97 = vector.shape_cast %96 : vector<2xf32> to vector<2x1xf32>
    %cst_43 = arith.constant 1.000000e+00 : f32
    %98 = vector.broadcast %cst_43 : f32 to vector<2x1xf32>
    %99 = arith.maximumf %97, %98 : vector<2x1xf32>
    %100 = vector.broadcast %99 : vector<2x1xf32> to vector<2x36xf32>
    %101 = arith.divf %95, %100 : vector<2x36xf32>
    %102 = vector.shape_cast %101 : vector<2x36xf32> to vector<2x6x6xf32>
    %103 = vector.extract_strided_slice %102 {offsets = [0, 0, 0], sizes = [2, 6, 1], strides = [1, 1, 1]} : vector<2x6x6xf32> to vector<2x6x1xf32>
    %104 = vector.extract_strided_slice %102 {offsets = [0, 0, 0], sizes = [2, 1, 6], strides = [1, 1, 1]} : vector<2x6x6xf32> to vector<2x1x6xf32>
    %105 = vector.broadcast %103 : vector<2x6x1xf32> to vector<2x6x6xf32>
    %106 = vector.broadcast %104 : vector<2x1x6xf32> to vector<2x6x6xf32>
    %107 = arith.mulf %105, %106 : vector<2x6x6xf32>
    %108 = vector.extract_strided_slice %102 {offsets = [0, 0, 1], sizes = [2, 6, 1], strides = [1, 1, 1]} : vector<2x6x6xf32> to vector<2x6x1xf32>
    %109 = vector.extract_strided_slice %102 {offsets = [0, 1, 0], sizes = [2, 1, 6], strides = [1, 1, 1]} : vector<2x6x6xf32> to vector<2x1x6xf32>
    %110 = vector.broadcast %108 : vector<2x6x1xf32> to vector<2x6x6xf32>
    %111 = vector.broadcast %109 : vector<2x1x6xf32> to vector<2x6x6xf32>
    %112 = arith.mulf %110, %111 : vector<2x6x6xf32>
    %113 = arith.addf %107, %112 : vector<2x6x6xf32>
    %114 = vector.extract_strided_slice %102 {offsets = [0, 0, 2], sizes = [2, 6, 1], strides = [1, 1, 1]} : vector<2x6x6xf32> to vector<2x6x1xf32>
    %115 = vector.extract_strided_slice %102 {offsets = [0, 2, 0], sizes = [2, 1, 6], strides = [1, 1, 1]} : vector<2x6x6xf32> to vector<2x1x6xf32>
    %116 = vector.broadcast %114 : vector<2x6x1xf32> to vector<2x6x6xf32>
    %117 = vector.broadcast %115 : vector<2x1x6xf32> to vector<2x6x6xf32>
    %118 = arith.mulf %116, %117 : vector<2x6x6xf32>
    %119 = arith.addf %113, %118 : vector<2x6x6xf32>
    %120 = vector.extract_strided_slice %102 {offsets = [0, 0, 3], sizes = [2, 6, 1], strides = [1, 1, 1]} : vector<2x6x6xf32> to vector<2x6x1xf32>
    %121 = vector.extract_strided_slice %102 {offsets = [0, 3, 0], sizes = [2, 1, 6], strides = [1, 1, 1]} : vector<2x6x6xf32> to vector<2x1x6xf32>
    %122 = vector.broadcast %120 : vector<2x6x1xf32> to vector<2x6x6xf32>
    %123 = vector.broadcast %121 : vector<2x1x6xf32> to vector<2x6x6xf32>
    %124 = arith.mulf %122, %123 : vector<2x6x6xf32>
    %125 = arith.addf %119, %124 : vector<2x6x6xf32>
    %126 = vector.extract_strided_slice %102 {offsets = [0, 0, 4], sizes = [2, 6, 1], strides = [1, 1, 1]} : vector<2x6x6xf32> to vector<2x6x1xf32>
    %127 = vector.extract_strided_slice %102 {offsets = [0, 4, 0], sizes = [2, 1, 6], strides = [1, 1, 1]} : vector<2x6x6xf32> to vector<2x1x6xf32>
    %128 = vector.broadcast %126 : vector<2x6x1xf32> to vector<2x6x6xf32>
    %129 = vector.broadcast %127 : vector<2x1x6xf32> to vector<2x6x6xf32>
    %130 = arith.mulf %128, %129 : vector<2x6x6xf32>
    %131 = arith.addf %125, %130 : vector<2x6x6xf32>
    %132 = vector.extract_strided_slice %102 {offsets = [0, 0, 5], sizes = [2, 6, 1], strides = [1, 1, 1]} : vector<2x6x6xf32> to vector<2x6x1xf32>
    %133 = vector.extract_strided_slice %102 {offsets = [0, 5, 0], sizes = [2, 1, 6], strides = [1, 1, 1]} : vector<2x6x6xf32> to vector<2x1x6xf32>
    %134 = vector.broadcast %132 : vector<2x6x1xf32> to vector<2x6x6xf32>
    %135 = vector.broadcast %133 : vector<2x1x6xf32> to vector<2x6x6xf32>
    %136 = arith.mulf %134, %135 : vector<2x6x6xf32>
    %137 = arith.addf %131, %136 : vector<2x6x6xf32>
    %138 = vector.shape_cast %137 : vector<2x6x6xf32> to vector<2x36xf32>
    %c0_44 = arith.constant 0 : index
    %c0_45 = arith.constant 0 : index
    %c0_46 = arith.constant 0 : index
    %139 = vector.load %arg7[%c0_44, %c0_45, %c0_46] : memref<1x2x36xf32, #tpu.memory_space<vmem>>, vector<1x2x36xf32>
    %140 = vector.shape_cast %139 : vector<1x2x36xf32> to vector<2x36xf32>
    %141 = vector.shape_cast %138 : vector<2x36xf32> to vector<1x2x36xf32>
    tpu.vector_store %arg7[%c0_44, %c0_45, %c0_46], %141 {strides = array<i32>} : memref<1x2x36xf32, #tpu.memory_space<vmem>>, vector<1x2x36xf32>,
    return
  }
  func.func @transform_0(%arg0: i32) -> (i32, i32, i32) {
    %c0_i32 = arith.constant 0 : i32
    %c0_i32_0 = arith.constant 0 : i32
    %c0_i32_1 = arith.constant 0 : i32
    return %arg0, %c0_i32, %c0_i32_0 : i32, i32, i32
  }
  func.func @transform_1(%arg0: i32) -> (i32, i32, i32) {
    %c0_i32 = arith.constant 0 : i32
    %c0_i32_0 = arith.constant 0 : i32
    %c0_i32_1 = arith.constant 0 : i32
    return %arg0, %c0_i32, %c0_i32_0 : i32, i32, i32
  }
  func.func @transform_2(%arg0: i32) -> (i32, i32, i32) {
    %c0_i32 = arith.constant 0 : i32
    %c0_i32_0 = arith.constant 0 : i32
    %c0_i32_1 = arith.constant 0 : i32
    return %arg0, %c0_i32, %c0_i32_0 : i32, i32, i32
  }
  func.func @transform_3(%arg0: i32) -> (i32, i32, i32) {
    %c0_i32 = arith.constant 0 : i32
    %c0_i32_0 = arith.constant 0 : i32
    %c0_i32_1 = arith.constant 0 : i32
    return %arg0, %c0_i32, %c0_i32_0 : i32, i32, i32
  }
  func.func @transform_4(%arg0: i32) -> (i32, i32, i32) {
    %c0_i32 = arith.constant 0 : i32
    %c0_i32_0 = arith.constant 0 : i32
    %c0_i32_1 = arith.constant 0 : i32
    return %arg0, %c0_i32, %c0_i32_0 : i32, i32, i32
  }
  func.func @transform_5(%arg0: i32) -> (i32, i32) {
    %c0_i32 = arith.constant 0 : i32
    %c0_i32_0 = arith.constant 0 : i32
    %c0_i32_1 = arith.constant 0 : i32
    return %c0_i32, %c0_i32_0 : i32, i32
  }
  func.func @transform_6(%arg0: i32) -> (i32, i32, i32) {
    %c0_i32 = arith.constant 0 : i32
    %c0_i32_0 = arith.constant 0 : i32
    %c0_i32_1 = arith.constant 0 : i32
    return %arg0, %c0_i32, %c0_i32_0 : i32, i32, i32
  }
}

</mosaic_0001>

<llo_original>
// kernel: tpu_custom_call.1
$region0: #{tpu_custom_call.1}
  #allocation0 [shape = 'u32[]', space=smem, size = 0x4, offset = 0x4, fixed_abs, tag = 'smem constant byte address 0x4 - core index']
  #allocation1 [shape = 'u32[144,128]{1,0:T(1,128)}', space=vmem, size = 0x12000, scoped, tag = 'internal scratch']
  %s0 = inlined_call_operand.vmem [shape: f32[4,16,16], index: 0, kind: input, shape index: {}]
  %s1 = inlined_call_operand.vmem [shape: f32[4,32,17], index: 1, kind: input, shape index: {}]
  %s2 = inlined_call_operand.vmem [shape: s32[4,32,1], index: 2, kind: input, shape index: {}]
  %s3 = inlined_call_operand.vmem [shape: s32[4,1,32], index: 3, kind: input, shape index: {}]
  %s4 = inlined_call_operand.vmem [shape: s32[4,1,16], index: 4, kind: input, shape index: {}]
  %s5 = inlined_call_operand.vmem [shape: f32[160,64], index: 5, kind: input, shape index: {}]
  %s6 = inlined_call_operand.hbm [shape: f32[4,2,36], index: 6, kind: output, shape index: {}]
  %s7 = sld [smem:[#allocation0]]
  $region57: #{tpu_custom_call.1} parent=0
    _
  %s9 = ssub.s32 1, %s7
  %s10 = scalar_select 0, %s9, %s7
  $region1: #{tpu_custom_call.1} parent=0
    #allocation2 [shape = 'u8[2048]{0}', space=vmem, size = 0x800, scoped, tag = 'output window, operand 0']
    #allocation3 [shape = 's32[2]{0}', space=sflag, size = 0x8, scoped, tag = 'scoped memory for tpu_custom_call.1']
    %11 = vsyncpa [#allocation3], 0
    %s12 = scalar_lea.sflag [#allocation3], 1
    %13 = vsyncpa %s12, 0
    loop: start=0, step=1, limit=6
    $region2: #{tpu_custom_call.1} parent=1 // loop_pre_header
      _
    $region3: #{tpu_custom_call.1} parent=1 // loop_header
      %s15 = sphi 0, %s19
      %p16 = scmp.ge.s32.totalorder %s15, 6
      %s25 = sphi 0, %s27
      %s28 = sphi 0, %s25
      %s29 = sphi 0, %s28
      %s45 = sphi 0, %s29
      %s51 = sphi 0, %s53
      %s54 = sphi 0, %s51
      %s55 = sphi 0, %s54
      %s71 = sphi 0, %s55
      %s77 = sphi 0, %s79
      %s80 = sphi 0, %s77
      %s81 = sphi 0, %s80
      %s97 = sphi 0, %s81
      %s103 = sphi 0, %s105
      %s106 = sphi 0, %s103
      %s107 = sphi 0, %s106
      %s123 = sphi 0, %s107
      %s129 = sphi 0, %s131
      %s132 = sphi 0, %s129
      %s133 = sphi 0, %s132
      %s149 = sphi 0, %s133
      %s153 = sphi 0, %s153
      %s155 = sphi 0, %s153
      %s156 = sphi 0, %s155
      %s170 = sphi 0, %s156
      %s176 = sphi 0, %s178
      %s179 = sphi 0, %s176
      %s180 = sphi 0, %s179
      %s196 = sphi 0, %s180
    $region4: #{tpu_custom_call.1} parent=1 // loop_header_branch
      %18 = sbr.rel (%p16) target = $region8
    $region5: #{tpu_custom_call.1} parent=1 // loop_body
      %s20 = ssub.s32 %s15, 1
      %s21 = ssub.s32 %s15, 2
      %s22 = sadd.s32 %s15, 1
      %s23 = ssub.s32 %s15, %s22
      %p24 = scmp.eq.s32.totalorder %s23, 0
      %s26 = sadd.s32 %s25, 1
      %s27 = scalar_select %p24, %s25, %s26
      %p30 = pneg %p24
      %p31 = scmp.eq.s32.totalorder %s15, 3
      %p32 = por %p30, %p31
      %p33 = scmp.ne.s32.totalorder %s25, %s28
      %p34 = scmp.eq.s32.totalorder %s15, 0
      %p35 = por %p33, %p34
      %p36 = scmp.ne.s32.totalorder %s25, %s28
      %p37 = scmp.eq.s32.totalorder %s20, 3
      %p38 = por %p36, %p37
      %p39 = scmp.ne.s32.totalorder %s28, %s29
      %p40 = scmp.eq.s32.totalorder %s20, 0
      %p41 = por %p39, %p40
      %p42 = scmp.ne.s32.totalorder %s28, %s29
      %p43 = scmp.eq.s32.totalorder %s21, 3
      %p44 = por %p42, %p43
      %p46 = scmp.ne.s32.totalorder %s29, %s45
      %p47 = scmp.eq.s32.totalorder %s21, 0
      %p48 = por %p46, %p47
      %s49 = ssub.s32 %s15, %s22
      %p50 = scmp.eq.s32.totalorder %s49, 0
      %s52 = sadd.s32 %s51, 1
      %s53 = scalar_select %p50, %s51, %s52
      %p56 = pneg %p50
      %p57 = scmp.eq.s32.totalorder %s15, 3
      %p58 = por %p56, %p57
      %p59 = scmp.ne.s32.totalorder %s51, %s54
      %p60 = scmp.eq.s32.totalorder %s15, 0
      %p61 = por %p59, %p60
      %p62 = scmp.ne.s32.totalorder %s51, %s54
      %p63 = scmp.eq.s32.totalorder %s20, 3
      %p64 = por %p62, %p63
      %p65 = scmp.ne.s32.totalorder %s54, %s55
      %p66 = scmp.eq.s32.totalorder %s20, 0
      %p67 = por %p65, %p66
      %p68 = scmp.ne.s32.totalorder %s54, %s55
      %p69 = scmp.eq.s32.totalorder %s21, 3
      %p70 = por %p68, %p69
      %p72 = scmp.ne.s32.totalorder %s55, %s71
      %p73 = scmp.eq.s32.totalorder %s21, 0
      %p74 = por %p72, %p73
      %s75 = ssub.s32 %s15, %s22
      %p76 = scmp.eq.s32.totalorder %s75, 0
      %s78 = sadd.s32 %s77, 1
      %s79 = scalar_select %p76, %s77, %s78
      %p82 = pneg %p76
      %p83 = scmp.eq.s32.totalorder %s15, 3
      %p84 = por %p82, %p83
      %p85 = scmp.ne.s32.totalorder %s77, %s80
      %p86 = scmp.eq.s32.totalorder %s15, 0
      %p87 = por %p85, %p86
      %p88 = scmp.ne.s32.totalorder %s77, %s80
      %p89 = scmp.eq.s32.totalorder %s20, 3
      %p90 = por %p88, %p89
      %p91 = scmp.ne.s32.totalorder %s80, %s81
      %p92 = scmp.eq.s32.totalorder %s20, 0
      %p93 = por %p91, %p92
      %p94 = scmp.ne.s32.totalorder %s80, %s81
      %p95 = scmp.eq.s32.totalorder %s21, 3
      %p96 = por %p94, %p95
      %p98 = scmp.ne.s32.totalorder %s81, %s97
      %p99 = scmp.eq.s32.totalorder %s21, 0
      %p100 = por %p98, %p99
      %s101 = ssub.s32 %s15, %s22
      %p102 = scmp.eq.s32.totalorder %s101, 0
      %s104 = sadd.s32 %s103, 1
      %s105 = scalar_select %p102, %s103, %s104
      %p108 = pneg %p102
      %p109 = scmp.eq.s32.totalorder %s15, 3
      %p110 = por %p108, %p109
      %p111 = scmp.ne.s32.totalorder %s103, %s106
      %p112 = scmp.eq.s32.totalorder %s15, 0
      %p113 = por %p111, %p112
      %p114 = scmp.ne.s32.totalorder %s103, %s106
      %p115 = scmp.eq.s32.totalorder %s20, 3
      %p116 = por %p114, %p115
      %p117 = scmp.ne.s32.totalorder %s106, %s107
      %p118 = scmp.eq.s32.totalorder %s20, 0
      %p119 = por %p117, %p118
      %p120 = scmp.ne.s32.totalorder %s106, %s107
      %p121 = scmp.eq.s32.totalorder %s21, 3
      %p122 = por %p120, %p121
      %p124 = scmp.ne.s32.totalorder %s107, %s123
      %p125 = scmp.eq.s32.totalorder %s21, 0
      %p126 = por %p124, %p125
      %s127 = ssub.s32 %s15, %s22
      %p128 = scmp.eq.s32.totalorder %s127, 0
      %s130 = sadd.s32 %s129, 1
      %s131 = scalar_select %p128, %s129, %s130
      %p134 = pneg %p128
      %p135 = scmp.eq.s32.totalorder %s15, 3
      %p136 = por %p134, %p135
      %p137 = scmp.ne.s32.totalorder %s129, %s132
      %p138 = scmp.eq.s32.totalorder %s15, 0
      %p139 = por %p137, %p138
      %p140 = scmp.ne.s32.totalorder %s129, %s132
      %p141 = scmp.eq.s32.totalorder %s20, 3
      %p142 = por %p140, %p141
      %p143 = scmp.ne.s32.totalorder %s132, %s133
      %p144 = scmp.eq.s32.totalorder %s20, 0
      %p145 = por %p143, %p144
      %p146 = scmp.ne.s32.totalorder %s132, %s133
      %p147 = scmp.eq.s32.totalorder %s21, 3
      %p148 = por %p146, %p147
      %p150 = scmp.ne.s32.totalorder %s133, %s149
      %p151 = scmp.eq.s32.totalorder %s21, 0
      %p152 = por %p150, %p151
      %s154 = sadd.s32 %s153, 1
      %p157 = scmp.eq.s32.totalorder %s15, 3
      %p158 = scmp.ne.s32.totalorder %s153, %s155
      %p159 = scmp.eq.s32.totalorder %s15, 0
      %p160 = por %p158, %p159
      %p161 = scmp.ne.s32.totalorder %s153, %s155
      %p162 = scmp.eq.s32.totalorder %s20, 3
      %p163 = por %p161, %p162
      %p164 = scmp.ne.s32.totalorder %s155, %s156
      %p165 = scmp.eq.s32.totalorder %s20, 0
      %p166 = por %p164, %p165
      %p167 = scmp.ne.s32.totalorder %s155, %s156
      %p168 = scmp.eq.s32.totalorder %s21, 3
      %p169 = por %p167, %p168
      %p171 = scmp.ne.s32.totalorder %s156, %s170
      %p172 = scmp.eq.s32.totalorder %s21, 0
      %p173 = por %p171, %p172
      %s174 = ssub.s32 %s15, %s22
      %p175 = scmp.eq.s32.totalorder %s174, 0
      %s177 = sadd.s32 %s176, 1
      %s178 = scalar_select %p175, %s176, %s177
      %p181 = pneg %p175
      %p182 = scmp.eq.s32.totalorder %s15, 3
      %p183 = por %p181, %p182
      %p184 = scmp.ne.s32.totalorder %s176, %s179
      %p185 = scmp.eq.s32.totalorder %s15, 0
      %p186 = por %p184, %p185
      %p187 = scmp.ne.s32.totalorder %s176, %s179
      %p188 = scmp.eq.s32.totalorder %s20, 3
      %p189 = por %p187, %p188
      %p190 = scmp.ne.s32.totalorder %s179, %s180
      %p191 = scmp.eq.s32.totalorder %s20, 0
      %p192 = por %p190, %p191
      %p193 = scmp.ne.s32.totalorder %s179, %s180
      %p194 = scmp.eq.s32.totalorder %s21, 3
      %p195 = por %p193, %p194
      %p197 = scmp.ne.s32.totalorder %s180, %s196
      %p198 = scmp.eq.s32.totalorder %s21, 0
      %p199 = por %p197, %p198
      %p200 = scmp.le.s32.totalorder 1, %s15
      %p201 = scmp.lt.s32.totalorder %s15, 5
      %p202 = pnand %p200, %p201
      %p203 = pneg %p202
      // Predicated region
      $region9: #{tpu_custom_call.1} parent=5 // pred_check
        _
      $region10: #{tpu_custom_call.1} parent=5 // pred_check_branch
        %205 = sbr.rel (%p202) target = $region12
      $region11: #{tpu_custom_call.1} parent=5 // pred_region
        %s206 = ssub.s32 %s15, 1
        // Predicated region
        $region13: #{tpu_custom_call.1} parent=11 // pred_check
          %p207 = pneg %p166
        $region14: #{tpu_custom_call.1} parent=11 // pred_check_branch
          %209 = sbr.rel (%p207) target = $region16
        $region15: #{tpu_custom_call.1} parent=11 // pred_region
          _
        $region16: #{tpu_custom_call.1} parent=11 // pred_fallthru
          _
      $region12: #{tpu_custom_call.1} parent=5 // pred_fallthru
        _
      %p210 = scmp.lt.s32.totalorder %s15, 4
      // Predicated region
      $region17: #{tpu_custom_call.1} parent=5 // pred_check
        %p211 = pneg %p210
      $region18: #{tpu_custom_call.1} parent=5 // pred_check_branch
        %213 = sbr.rel (%p211) target = $region20
      $region19: #{tpu_custom_call.1} parent=5 // pred_region
        // Predicated region
        $region21: #{tpu_custom_call.1} parent=19 // pred_check
          %p214 = pneg %p35
        $region22: #{tpu_custom_call.1} parent=19 // pred_check_branch
          %216 = sbr.rel (%p214) target = $region24
        $region23: #{tpu_custom_call.1} parent=19 // pred_region
          %p217 = scmp.lt.s32.totalorder %s15, 3
          %s218 = scalar_select %p217, %s15, 3
          %s219 = smul.addr %s218, 2
          %s220 = smul.addr %s219, 8
          %s221 = scalar_lea.vmem %s0, %s220
        $region24: #{tpu_custom_call.1} parent=19 // pred_fallthru
          _
        // Predicated region
        $region25: #{tpu_custom_call.1} parent=19 // pred_check
          %p222 = pneg %p61
        $region26: #{tpu_custom_call.1} parent=19 // pred_check_branch
          %224 = sbr.rel (%p222) target = $region28
        $region27: #{tpu_custom_call.1} parent=19 // pred_region
          %p225 = scmp.lt.s32.totalorder %s15, 3
          %s226 = scalar_select %p225, %s15, 3
          %s227 = smul.addr %s226, 4
          %s228 = smul.addr %s227, 8
          %s229 = scalar_lea.vmem %s1, %s228
        $region28: #{tpu_custom_call.1} parent=19 // pred_fallthru
          _
        // Predicated region
        $region29: #{tpu_custom_call.1} parent=19 // pred_check
          %p230 = pneg %p87
        $region30: #{tpu_custom_call.1} parent=19 // pred_check_branch
          %232 = sbr.rel (%p230) target = $region32
        $region31: #{tpu_custom_call.1} parent=19 // pred_region
          %p233 = scmp.lt.s32.totalorder %s15, 3
          %s234 = scalar_select %p233, %s15, 3
          %s235 = smul.addr %s234, 4
          %s236 = smul.addr %s235, 8
          %s237 = scalar_lea.vmem %s2, %s236
        $region32: #{tpu_custom_call.1} parent=19 // pred_fallthru
          _
        // Predicated region
        $region33: #{tpu_custom_call.1} parent=19 // pred_check
          %p238 = pneg %p113
        $region34: #{tpu_custom_call.1} parent=19 // pred_check_branch
          %240 = sbr.rel (%p238) target = $region36
        $region35: #{tpu_custom_call.1} parent=19 // pred_region
          %p241 = scmp.lt.s32.totalorder %s15, 3
          %s242 = scalar_select %p241, %s15, 3
          %s243 = scalar_lea.vmem %s3, %s242
        $region36: #{tpu_custom_call.1} parent=19 // pred_fallthru
          _
        // Predicated region
        $region37: #{tpu_custom_call.1} parent=19 // pred_check
          %p244 = pneg %p139
        $region38: #{tpu_custom_call.1} parent=19 // pred_check_branch
          %246 = sbr.rel (%p244) target = $region40
        $region39: #{tpu_custom_call.1} parent=19 // pred_region
          %p247 = scmp.lt.s32.totalorder %s15, 3
          %s248 = scalar_select %p247, %s15, 3
          %s249 = scalar_lea.vmem %s4, %s248
        $region40: #{tpu_custom_call.1} parent=19 // pred_fallthru
          _
      $region20: #{tpu_custom_call.1} parent=5 // pred_fallthru
        _
      %p250 = scmp.le.s32.totalorder 1, %s15
      %p251 = scmp.lt.s32.totalorder %s15, 5
      %p252 = pnand %p250, %p251
      %p253 = pneg %p252
      // Predicated region
      $region41: #{tpu_custom_call.1} parent=5 // pred_check
        _
      $region42: #{tpu_custom_call.1} parent=5 // pred_check_branch
        %255 = sbr.rel (%p252) target = $region44
      $region43: #{tpu_custom_call.1} parent=5 // pred_region
        %s256 = ssub.s32 %s15, 1
        %p257 = scmp.lt.s32.totalorder %s20, 3
        %s258 = scalar_select %p257, %s20, 3
        %s259 = smul.addr %s258, 2
        %s260 = smul.addr %s259, 8
        %s261 = scalar_lea.vmem %s0, %s260
        %p262 = pneg %p41
        %p263 = pneg %p38
        %p264 = scmp.lt.s32.totalorder %s20, 3
        %s265 = scalar_select %p264, %s20, 3
        %s266 = smul.addr %s265, 4
        %s267 = smul.addr %s266, 8
        %s268 = scalar_lea.vmem %s1, %s267
        %p269 = pneg %p67
        %p270 = pneg %p64
        %p271 = scmp.lt.s32.totalorder %s20, 3
        %s272 = scalar_select %p271, %s20, 3
        %s273 = smul.addr %s272, 4
        %s274 = smul.addr %s273, 8
        %s275 = scalar_lea.vmem %s2, %s274
        %p276 = pneg %p93
        %p277 = pneg %p90
        %p278 = scmp.lt.s32.totalorder %s20, 3
        %s279 = scalar_select %p278, %s20, 3
        %s280 = scalar_lea.vmem %s3, %s279
        %p281 = pneg %p119
        %p282 = pneg %p116
        %p283 = scmp.lt.s32.totalorder %s20, 3
        %s284 = scalar_select %p283, %s20, 3
        %s285 = scalar_lea.vmem %s4, %s284
        %p286 = pneg %p145
        %p287 = pneg %p142
        %p288 = pneg %p166
        %p289 = pneg %p163
        %p290 = pneg %p192
        %p291 = pneg %p189
        %s292 = sand.u32 %s179, 1
        %s293 = scalar_lea.sflag [#allocation3], %s292
        %s294 = sand.u32 %s179, 1
        %s295 = smul.addr %s294, 2
        %s296 = scalar_lea.vmem [#allocation2], %s295
        %p297 = scmp.lt.s32.totalorder %s20, 3
        %s298 = scalar_select %p297, %s20, 3
        %s299 = smul.addr %s298, 2
        %s300 = smul.addr %s299, 8
        %s301 = scalar_lea.vmem %s0, %s300
        %p302 = scmp.lt.s32.totalorder %s20, 3
        %s303 = scalar_select %p302, %s20, 3
        %s304 = smul.addr %s303, 4
        %s305 = smul.addr %s304, 8
        %s306 = scalar_lea.vmem %s1, %s305
        %p307 = scmp.lt.s32.totalorder %s20, 3
        %s308 = scalar_select %p307, %s20, 3
        %s309 = smul.addr %s308, 4
        %s310 = smul.addr %s309, 8
        %s311 = scalar_lea.vmem %s2, %s310
        %p312 = scmp.lt.s32.totalorder %s20, 3
        %s313 = scalar_select %p312, %s20, 3
        %s314 = scalar_lea.vmem %s3, %s313
        %p315 = scmp.lt.s32.totalorder %s20, 3
        %s316 = scalar_select %p315, %s20, 3
        %s317 = scalar_lea.vmem %s4, %s316
        %v319 = vld [vmem:[%s301] sm:$0xff]
        %v320 = vld [vmem:[%s301 + $0x8] sm:$0xff]
        %v321 = vld [vmem:[%s306] sm:$0xff]
        %v322 = vld [vmem:[%s306 + $0x8] sm:$0xff]
        %v323 = vld [vmem:[%s306 + $0x10] sm:$0xff]
        %v324 = vld [vmem:[%s306 + $0x18] sm:$0xff]
        %v325 = vpack.c.bf16 %v322, %v321
        %v326 = vpack.c.bf16 %v324, %v323
        %v327 = vld [vmem:[%s311] sm:$0xff]
        %v328 = vld [vmem:[%s311 + $0x8] sm:$0xff]
        %v329 = vld [vmem:[%s311 + $0x10] sm:$0xff]
        %v330 = vld [vmem:[%s311 + $0x18] sm:$0xff]
        %v331 = vld [vmem:[%s314] sm:$0x1]
        %v332 = vld [vmem:[%s317] sm:$0x1]
        %v333 = vld [vmem:[%s5] sm:$0xff]
        %v334 = vld [vmem:[%s5 + $0x8] sm:$0xff]
        %v335 = vld [vmem:[%s5 + $0x10] sm:$0x1]
        %v336 = vpack.c.bf16 %v334, %v333
        %v337 = vpack.c.bf16 %v335, %v335
        %v338 = vld [vmem:[%s5 + $0x18] sm:$0xff]
        %v339 = vld [vmem:[%s5 + $0x20] sm:$0xff]
        %v340 = vld [vmem:[%s5 + $0x28] sm:$0xff]
        %v341 = vld [vmem:[%s5 + $0x30] sm:$0xff]
        %v342 = vpack.c.bf16 %v339, %v338
        %v343 = vpack.c.bf16 %v341, %v340
        %v344 = vld [vmem:[%s5 + $0x78] sm:$0xff]
        %v345 = vld [vmem:[%s5 + $0x80] sm:$0xff]
        %v346 = vld [vmem:[%s5 + $0x88] sm:$0xff]
        %v347 = vld [vmem:[%s5 + $0x90] sm:$0xff]
        %v348 = vld [vmem:[%s5 + $0x98] sm:$0x1]
        %vm349 = vcmask 138240
        %v351 = vsel %vm349, %v325, 0
        %v354 = vsel %vm349, %v326, 0
        %vm356 = vcmask 1040384
        %v357 = vsel 0, 4294967295, 65535
        %v358 = vsel %vm356, %v357, 0
        %v360 = vand.u32 %v337, %v358
        %362 = vmatprep.subr.bf16.mxu0 0
        %363 = vmatpush1.bf16.msra.mxu0 %v336
        %364 = vmatprep.subr.bf16.mxu0 0
        %365 = vmatpush1.bf16.msra.mxu0 %v360
        %366 = vmatprep.subr.bf16.mxu0 0
        %367 = vmatpush1.bf16.msra.mxu0 0
        %368 = vmatprep.subr.bf16.mxu0 0
        %369 = vmatpush1.bf16.msra.mxu0 0
        %370 = vmatprep.subr.bf16.mxu0 0
        %371 = vmatpush1.bf16.msra.mxu0 0
        %372 = vmatprep.subr.bf16.mxu0 0
        %373 = vmatpush1.bf16.msra.mxu0 0
        %374 = vmatprep.subr.bf16.mxu0 0
        %375 = vmatpush1.bf16.msra.mxu0 0
        %376 = vmatprep.subr.bf16.mxu0 0
        %377 = vmatpush1.bf16.msra.mxu0 0
        %378 = vmatprep.subr.bf16.mxu0 0
        %379 = vmatpush1.bf16.msra.mxu0 0
        %380 = vmatprep.subr.bf16.mxu0 0
        %381 = vmatpush1.bf16.msra.mxu0 0
        %382 = vmatprep.subr.bf16.mxu0 0
        %383 = vmatpush1.bf16.msra.mxu0 0
        %384 = vmatprep.subr.bf16.mxu0 0
        %385 = vmatpush1.bf16.msra.mxu0 0
        %386 = vmatprep.subr.bf16.mxu0 0
        %387 = vmatpush1.bf16.msra.mxu0 0
        %388 = vmatprep.subr.bf16.mxu0 0
        %389 = vmatpush1.bf16.msra.mxu0 0
        %390 = vmatprep.subr.bf16.mxu0 0
        %391 = vmatpush1.bf16.msra.mxu0 0
        %392 = vmatprep.subr.bf16.mxu0 0
        %393 = vmatpush1.bf16.msra.mxu0 0
        %394 = vmatprep.mubr.bf16.mxu0 0
        %395 = vmatmul.mubr.bf16.gmra.mrb[0].mxu0 %v351
        %v396 = vpop.f32.mrb[0].mxu0
        %v397 = vadd.f32 0.0, %v396
        %v398 = vpop.f32.mrb[0].mxu0
        %v399 = vpop.f32.mrb[0].mxu0
        %v400 = vadd.f32 0.0, %v399
        %v401 = vpop.f32.mrb[0].mxu0
        %402 = vmatprep.mubr.bf16.mxu0 0
        %403 = vmatmul.mubr.bf16.gmra.mrb[0].mxu0 %v354
        %v404 = vpop.f32.mrb[0].mxu0
        %v405 = vadd.f32 0.0, %v404
        %v406 = vpop.f32.mrb[0].mxu0
        %v407 = vpop.f32.mrb[0].mxu0
        %v408 = vadd.f32 0.0, %v407
        %v409 = vpop.f32.mrb[0].mxu0
        %410 = vdwg.mxu0
        %v411 = vxor.u32 %v397, 2147483648
        %v412 = vxor.u32 %v400, 2147483648
        %v413 = vxor.u32 %v405, 2147483648
        %v414 = vxor.u32 %v408, 2147483648
        %v415 = vmul.f32 %v411, 1.442695
        %v416 = vpow.pop %v415
        %v417 = vmul.f32 %v412, 1.442695
        %v418 = vpow.pop %v417
        %v419 = vmul.f32 %v413, 1.442695
        %v420 = vpow.pop %v419
        %v421 = vmul.f32 %v414, 1.442695
        %v422 = vpow.pop %v421
        %v423 = vadd.f32 %v416, 1.0
        %v424 = vadd.f32 %v418, 1.0
        %v425 = vadd.f32 %v420, 1.0
        %v426 = vadd.f32 %v422, 1.0
        %v427 = vrcp.pop %v423
        %v428 = vmul.f32 1.0, %v427
        %v429 = vrcp.pop %v424
        %v430 = vmul.f32 1.0, %v429
        %v431 = vrcp.pop %v425
        %v432 = vmul.f32 1.0, %v431
        %v433 = vrcp.pop %v426
        %v434 = vmul.f32 1.0, %v433
        %v435 = vmul.f32 %v397, %v428
        %v436 = vmul.f32 %v400, %v430
        %v437 = vmul.f32 %v405, %v432
        %v438 = vmul.f32 %v408, %v434
        %v439 = vpack.c.bf16 %v436, %v435
        %v440 = vpack.c.bf16 %v438, %v437
        %vm441 = vcmask 261120
        %v443 = vsel %vm441, %v439, 0
        %v446 = vsel %vm441, %v440, 0
        %448 = vmatprep.subr.bf16.mxu0 0
        %449 = vmatpush1.bf16.msra.mxu0 %v342
        %450 = vmatprep.subr.bf16.mxu0 0
        %451 = vmatpush1.bf16.msra.mxu0 %v343
        %452 = vmatprep.subr.bf16.mxu0 0
        %453 = vmatpush1.bf16.msra.mxu0 0
        %454 = vmatprep.subr.bf16.mxu0 0
        %455 = vmatpush1.bf16.msra.mxu0 0
        %456 = vmatprep.subr.bf16.mxu0 0
        %457 = vmatpush1.bf16.msra.mxu0 0
        %458 = vmatprep.subr.bf16.mxu0 0
        %459 = vmatpush1.bf16.msra.mxu0 0
        %460 = vmatprep.subr.bf16.mxu0 0
        %461 = vmatpush1.bf16.msra.mxu0 0
        %462 = vmatprep.subr.bf16.mxu0 0
        %463 = vmatpush1.bf16.msra.mxu0 0
        %464 = vmatprep.subr.bf16.mxu0 0
        %465 = vmatpush1.bf16.msra.mxu0 0
        %466 = vmatprep.subr.bf16.mxu0 0
        %467 = vmatpush1.bf16.msra.mxu0 0
        %468 = vmatprep.subr.bf16.mxu0 0
        %469 = vmatpush1.bf16.msra.mxu0 0
        %470 = vmatprep.subr.bf16.mxu0 0
        %471 = vmatpush1.bf16.msra.mxu0 0
        %472 = vmatprep.subr.bf16.mxu0 0
        %473 = vmatpush1.bf16.msra.mxu0 0
        %474 = vmatprep.subr.bf16.mxu0 0
        %475 = vmatpush1.bf16.msra.mxu0 0
        %476 = vmatprep.subr.bf16.mxu0 0
        %477 = vmatpush1.bf16.msra.mxu0 0
        %478 = vmatprep.subr.bf16.mxu0 0
        %479 = vmatpush1.bf16.msra.mxu0 0
        %480 = vmatprep.mubr.bf16.mxu0 0
        %481 = vmatmul.mubr.bf16.gmra.mrb[0].mxu0 %v443
        %v482 = vpop.f32.mrb[0].mxu0
        %v483 = vadd.f32 0.0, %v482
        %v484 = vpop.f32.mrb[0].mxu0
        %v485 = vpop.f32.mrb[0].mxu0
        %v486 = vadd.f32 0.0, %v485
        %v487 = vpop.f32.mrb[0].mxu0
        %488 = vmatprep.mubr.bf16.mxu0 0
        %489 = vmatmul.mubr.bf16.gmra.mrb[0].mxu0 %v446
        %v490 = vpop.f32.mrb[0].mxu0
        %v491 = vadd.f32 0.0, %v490
        %v492 = vpop.f32.mrb[0].mxu0
        %v493 = vpop.f32.mrb[0].mxu0
        %v494 = vadd.f32 0.0, %v493
        %v495 = vpop.f32.mrb[0].mxu0
        %496 = vdwg.mxu0
        %501 = vrot.lane.b32.xlu0 %v397, 96
        %v502 = vpop.permute.xlu0 %501
        %503 = vrot.lane.b32.xlu0 %v400, 96
        %v504 = vpop.permute.xlu0 %503
        %505 = vrot.lane.b32.xlu0 %v405, 96
        %v506 = vpop.permute.xlu0 %505
        %507 = vrot.lane.b32.xlu0 %v408, 96
        %v508 = vpop.permute.xlu0 %507
        %v513 = vmul.f32 %v483, %v502
        %v514 = vmul.f32 %v486, %v504
        %v515 = vmul.f32 %v491, %v506
        %v516 = vmul.f32 %v494, %v508
        %v517 = vlaneseq
        %v518 = vand.u32 %v517, 127
        %519 = vset.pattern.permute.xlu0 0
        %520 = vperm.xlu0 %519, %v327
        %v521 = vpop.permute.xlu0 %520
        %522 = vset.pattern.permute.xlu0 0
        %523 = vperm.xlu0 %522, %v328
        %v524 = vpop.permute.xlu0 %523
        %525 = vset.pattern.permute.xlu0 0
        %526 = vperm.xlu0 %525, %v329
        %v527 = vpop.permute.xlu0 %526
        %528 = vset.pattern.permute.xlu0 0
        %529 = vperm.xlu0 %528, %v330
        %v530 = vpop.permute.xlu0 %529
        %vm531 = vcmp.eq.s32.totalorder %v518, %v521
        %vm532 = vcmp.eq.s32.totalorder %v518, %v524
        %vm533 = vcmp.eq.s32.totalorder %v518, %v527
        %vm534 = vcmp.eq.s32.totalorder %v518, %v530
        %v535 = vsel %vm531, 1.0, 0.0
        %v536 = vsel %vm532, 1.0, 0.0
        %v537 = vsel %vm533, 1.0, 0.0
        %v538 = vsel %vm534, 1.0, 0.0
        %v539 = vpack.c.bf16 %v536, %v535
        %v540 = vpack.c.bf16 %v538, %v537
        %v541 = vlaneseq
        %v542 = vshrl.u32 %v541, 7
        %v543 = vadd.s32 %v542, 8
        %v544 = vlaneseq
        %v545 = vshrl.u32 %v544, 7
        %v546 = vsub.s32 0, %v545
        %v547 = vrot.slane %v331, %v546
        %vm548 = vcmp.eq.s32.totalorder %v542, %v547
        %vm549 = vcmp.eq.s32.totalorder %v543, %v547
        %v550 = vsel %vm548, 1.0, 0.0
        %v551 = vsel %vm549, 1.0, 0.0
        %v552 = vpack.c.bf16 %v551, %v550
        %v553 = vlaneseq
        %v554 = vshrl.u32 %v553, 7
        %v555 = vsub.s32 0, %v554
        %v556 = vrot.slane %v332, %v555
        %vm557 = vcmp.eq.s32.totalorder %v542, %v556
        %v558 = vsel %vm557, 1.0, 0.0
        %v559 = vpack.c.bf16 %v320, %v319
        %vm560 = vcmask 130048
        %v562 = vsel %vm560, %v539, 0
        %v565 = vsel %vm560, %v540, 0
        %567 = vmatprep.subr.bf16.mxu0 0
        %568 = vmatpush1.bf16.msra.mxu0 %v559
        %569 = vmatprep.subr.bf16.mxu0 0
        %570 = vmatpush1.bf16.msra.mxu0 0
        %571 = vmatprep.subr.bf16.mxu0 0
        %572 = vmatpush1.bf16.msra.mxu0 0
        %573 = vmatprep.subr.bf16.mxu0 0
        %574 = vmatpush1.bf16.msra.mxu0 0
        %575 = vmatprep.subr.bf16.mxu0 0
        %576 = vmatpush1.bf16.msra.mxu0 0
        %577 = vmatprep.subr.bf16.mxu0 0
        %578 = vmatpush1.bf16.msra.mxu0 0
        %579 = vmatprep.subr.bf16.mxu0 0
        %580 = vmatpush1.bf16.msra.mxu0 0
        %581 = vmatprep.subr.bf16.mxu0 0
        %582 = vmatpush1.bf16.msra.mxu0 0
        %583 = vmatprep.subr.bf16.mxu0 0
        %584 = vmatpush1.bf16.msra.mxu0 0
        %585 = vmatprep.subr.bf16.mxu0 0
        %586 = vmatpush1.bf16.msra.mxu0 0
        %587 = vmatprep.subr.bf16.mxu0 0
        %588 = vmatpush1.bf16.msra.mxu0 0
        %589 = vmatprep.subr.bf16.mxu0 0
        %590 = vmatpush1.bf16.msra.mxu0 0
        %591 = vmatprep.subr.bf16.mxu0 0
        %592 = vmatpush1.bf16.msra.mxu0 0
        %593 = vmatprep.subr.bf16.mxu0 0
        %594 = vmatpush1.bf16.msra.mxu0 0
        %595 = vmatprep.subr.bf16.mxu0 0
        %596 = vmatpush1.bf16.msra.mxu0 0
        %597 = vmatprep.subr.bf16.mxu0 0
        %598 = vmatpush1.bf16.msra.mxu0 0
        %599 = vmatprep.mubr.bf16.mxu0 0
        %600 = vmatmul.mubr.bf16.gmra.mrb[0].mxu0 %v562
        %v601 = vpop.f32.mrb[0].mxu0
        %v602 = vadd.f32 0.0, %v601
        %v603 = vpop.f32.mrb[0].mxu0
        %v604 = vpop.f32.mrb[0].mxu0
        %v605 = vadd.f32 0.0, %v604
        %v606 = vpop.f32.mrb[0].mxu0
        %607 = vmatprep.mubr.bf16.mxu0 0
        %608 = vmatmul.mubr.bf16.gmra.mrb[0].mxu0 %v565
        %v609 = vpop.f32.mrb[0].mxu0
        %v610 = vadd.f32 0.0, %v609
        %v611 = vpop.f32.mrb[0].mxu0
        %v612 = vpop.f32.mrb[0].mxu0
        %v613 = vadd.f32 0.0, %v612
        %v614 = vpop.f32.mrb[0].mxu0
        %615 = vdwg.mxu0
        %v616 = vmul.f32 %v602, %v513
        %v617 = vmul.f32 %v605, %v514
        %v618 = vmul.f32 %v610, %v515
        %v619 = vmul.f32 %v613, %v516
        %v620 = vpack.c.bf16 %v617, %v616
        %v621 = vpack.c.bf16 %v619, %v618
        %v623 = vsel %vm441, %v552, 0
        %625 = vmatprep.subr.bf16.mxu0 0
        %626 = vmatpush1.bf16.msra.mxu0 %v620
        %627 = vmatprep.subr.bf16.mxu0 0
        %628 = vmatpush1.bf16.msra.mxu0 %v621
        %629 = vmatprep.subr.bf16.mxu0 0
        %630 = vmatpush1.bf16.msra.mxu0 0
        %631 = vmatprep.subr.bf16.mxu0 0
        %632 = vmatpush1.bf16.msra.mxu0 0
        %633 = vmatprep.subr.bf16.mxu0 0
        %634 = vmatpush1.bf16.msra.mxu0 0
        %635 = vmatprep.subr.bf16.mxu0 0
        %636 = vmatpush1.bf16.msra.mxu0 0
        %637 = vmatprep.subr.bf16.mxu0 0
        %638 = vmatpush1.bf16.msra.mxu0 0
        %639 = vmatprep.subr.bf16.mxu0 0
        %640 = vmatpush1.bf16.msra.mxu0 0
        %641 = vmatprep.subr.bf16.mxu0 0
        %642 = vmatpush1.bf16.msra.mxu0 0
        %643 = vmatprep.subr.bf16.mxu0 0
        %644 = vmatpush1.bf16.msra.mxu0 0
        %645 = vmatprep.subr.bf16.mxu0 0
        %646 = vmatpush1.bf16.msra.mxu0 0
        %647 = vmatprep.subr.bf16.mxu0 0
        %648 = vmatpush1.bf16.msra.mxu0 0
        %649 = vmatprep.subr.bf16.mxu0 0
        %650 = vmatpush1.bf16.msra.mxu0 0
        %651 = vmatprep.subr.bf16.mxu0 0
        %652 = vmatpush1.bf16.msra.mxu0 0
        %653 = vmatprep.subr.bf16.mxu0 0
        %654 = vmatpush1.bf16.msra.mxu0 0
        %655 = vmatprep.subr.bf16.mxu0 0
        %656 = vmatpush1.bf16.msra.mxu0 0
        %657 = vmatprep.mubr.bf16.mxu0 0
        %658 = vmatmul.mubr.bf16.gmra.mrb[0].mxu0 %v623
        %v659 = vpop.f32.mrb[0].mxu0
        %v660 = vadd.f32 0.0, %v659
        %v661 = vpop.f32.mrb[0].mxu0
        %v662 = vpop.f32.mrb[0].mxu0
        %v663 = vadd.f32 0.0, %v662
        %v664 = vpop.f32.mrb[0].mxu0
        %665 = vdwg.mxu0
        %668 = vrot.lane.b32.xlu0 %v319, 16
        %v669 = vpop.permute.xlu0 %668
        %670 = vrot.lane.b32.xlu0 %v320, 16
        %v671 = vpop.permute.xlu0 %670
        %v674 = vsel %vm560, %v660, %v669
        %v675 = vsel %vm560, %v663, %v671
        %v676 = vpack.c.bf16 %v675, %v674
        %v677 = vld [vmem:[%s5 + $0x38] sm:$0xff]
        %v678 = vld [vmem:[%s5 + $0x40] sm:$0xff]
        %v679 = vld [vmem:[%s5 + $0x48] sm:$0xff]
        %v680 = vld [vmem:[%s5 + $0x50] sm:$0xff]
        %v681 = vpack.c.bf16 %v678, %v677
        %v682 = vpack.c.bf16 %v680, %v679
        %v684 = vsel %vm441, %v676, 0
        %686 = vmatprep.subr.bf16.mxu0 0
        %687 = vmatpush1.bf16.msra.mxu0 %v681
        %688 = vmatprep.subr.bf16.mxu0 0
        %689 = vmatpush1.bf16.msra.mxu0 %v682
        %690 = vmatprep.subr.bf16.mxu0 0
        %691 = vmatpush1.bf16.msra.mxu0 0
        %692 = vmatprep.subr.bf16.mxu0 0
        %693 = vmatpush1.bf16.msra.mxu0 0
        %694 = vmatprep.subr.bf16.mxu0 0
        %695 = vmatpush1.bf16.msra.mxu0 0
        %696 = vmatprep.subr.bf16.mxu0 0
        %697 = vmatpush1.bf16.msra.mxu0 0
        %698 = vmatprep.subr.bf16.mxu0 0
        %699 = vmatpush1.bf16.msra.mxu0 0
        %700 = vmatprep.subr.bf16.mxu0 0
        %701 = vmatpush1.bf16.msra.mxu0 0
        %702 = vmatprep.subr.bf16.mxu0 0
        %703 = vmatpush1.bf16.msra.mxu0 0
        %704 = vmatprep.subr.bf16.mxu0 0
        %705 = vmatpush1.bf16.msra.mxu0 0
        %706 = vmatprep.subr.bf16.mxu0 0
        %707 = vmatpush1.bf16.msra.mxu0 0
        %708 = vmatprep.subr.bf16.mxu0 0
        %709 = vmatpush1.bf16.msra.mxu0 0
        %710 = vmatprep.subr.bf16.mxu0 0
        %711 = vmatpush1.bf16.msra.mxu0 0
        %712 = vmatprep.subr.bf16.mxu0 0
        %713 = vmatpush1.bf16.msra.mxu0 0
        %714 = vmatprep.subr.bf16.mxu0 0
        %715 = vmatpush1.bf16.msra.mxu0 0
        %716 = vmatprep.subr.bf16.mxu0 0
        %717 = vmatpush1.bf16.msra.mxu0 0
        %718 = vmatprep.mubr.bf16.mxu0 0
        %719 = vmatmul.mubr.bf16.gmra.mrb[0].mxu0 %v684
        %v720 = vpop.f32.mrb[0].mxu0
        %v721 = vadd.f32 0.0, %v720
        %v722 = vpop.f32.mrb[0].mxu0
        %v723 = vpop.f32.mrb[0].mxu0
        %v724 = vadd.f32 0.0, %v723
        %v725 = vpop.f32.mrb[0].mxu0
        %726 = vdwg.mxu0
        %v727 = vxor.u32 %v721, 2147483648
        %v728 = vxor.u32 %v724, 2147483648
        %v729 = vmul.f32 %v727, 1.442695
        %v730 = vpow.pop %v729
        %v731 = vmul.f32 %v728, 1.442695
        %v732 = vpow.pop %v731
        %v733 = vadd.f32 %v730, 1.0
        %v734 = vadd.f32 %v732, 1.0
        %v735 = vrcp.pop %v733
        %v736 = vmul.f32 1.0, %v735
        %v737 = vrcp.pop %v734
        %v738 = vmul.f32 1.0, %v737
        %v739 = vmul.f32 %v721, %v736
        %v740 = vmul.f32 %v724, %v738
        %v741 = vpack.c.bf16 %v740, %v739
        %742 = vmatprep.subr.bf16.mxu0 0
        %743 = vmatpush1.bf16.msra.mxu0 %v741
        %744 = vmatprep.subr.bf16.mxu0 0
        %745 = vmatpush1.bf16.msra.mxu0 0
        %746 = vmatprep.subr.bf16.mxu0 0
        %747 = vmatpush1.bf16.msra.mxu0 0
        %748 = vmatprep.subr.bf16.mxu0 0
        %749 = vmatpush1.bf16.msra.mxu0 0
        %750 = vmatprep.subr.bf16.mxu0 0
        %751 = vmatpush1.bf16.msra.mxu0 0
        %752 = vmatprep.subr.bf16.mxu0 0
        %753 = vmatpush1.bf16.msra.mxu0 0
        %754 = vmatprep.subr.bf16.mxu0 0
        %755 = vmatpush1.bf16.msra.mxu0 0
        %756 = vmatprep.subr.bf16.mxu0 0
        %757 = vmatpush1.bf16.msra.mxu0 0
        %758 = vmatprep.subr.bf16.mxu0 0
        %759 = vmatpush1.bf16.msra.mxu0 0
        %760 = vmatprep.subr.bf16.mxu0 0
        %761 = vmatpush1.bf16.msra.mxu0 0
        %762 = vmatprep.subr.bf16.mxu0 0
        %763 = vmatpush1.bf16.msra.mxu0 0
        %764 = vmatprep.subr.bf16.mxu0 0
        %765 = vmatpush1.bf16.msra.mxu0 0
        %766 = vmatprep.subr.bf16.mxu0 0
        %767 = vmatpush1.bf16.msra.mxu0 0
        %768 = vmatprep.subr.bf16.mxu0 0
        %769 = vmatpush1.bf16.msra.mxu0 0
        %770 = vmatprep.subr.bf16.mxu0 0
        %771 = vmatpush1.bf16.msra.mxu0 0
        %772 = vmatprep.subr.bf16.mxu0 0
        %773 = vmatpush1.bf16.msra.mxu0 0
        %774 = vmatprep.mubr.bf16.mxu0 0
        %775 = vmatmul.mubr.bf16.gmra.mrb[0].mxu0 %v562
        %v776 = vpop.f32.mrb[0].mxu0
        %v777 = vadd.f32 0.0, %v776
        %v778 = vpop.f32.mrb[0].mxu0
        %v779 = vpop.f32.mrb[0].mxu0
        %v780 = vadd.f32 0.0, %v779
        %v781 = vpop.f32.mrb[0].mxu0
        %782 = vmatprep.mubr.bf16.mxu0 0
        %783 = vmatmul.mubr.bf16.gmra.mrb[0].mxu0 %v565
        %v784 = vpop.f32.mrb[0].mxu0
        %v785 = vadd.f32 0.0, %v784
        %v786 = vpop.f32.mrb[0].mxu0
        %v787 = vpop.f32.mrb[0].mxu0
        %v788 = vadd.f32 0.0, %v787
        %v789 = vpop.f32.mrb[0].mxu0
        %790 = vdwg.mxu0
        %795 = vrot.lane.b32.xlu0 %v513, 112
        %v796 = vpop.permute.xlu0 %795
        %797 = vrot.lane.b32.xlu0 %v514, 112
        %v798 = vpop.permute.xlu0 %797
        %799 = vrot.lane.b32.xlu0 %v515, 112
        %v800 = vpop.permute.xlu0 %799
        %801 = vrot.lane.b32.xlu0 %v516, 112
        %v802 = vpop.permute.xlu0 %801
        %v807 = vmul.f32 %v777, %v796
        %v808 = vmul.f32 %v780, %v798
        %v809 = vmul.f32 %v785, %v800
        %v810 = vmul.f32 %v788, %v802
        %v811 = vpack.c.bf16 %v808, %v807
        %v812 = vpack.c.bf16 %v810, %v809
        %813 = vmatprep.subr.bf16.mxu0 0
        %814 = vmatpush1.bf16.msra.mxu0 %v811
        %815 = vmatprep.subr.bf16.mxu0 0
        %816 = vmatpush1.bf16.msra.mxu0 %v812
        %817 = vmatprep.subr.bf16.mxu0 0
        %818 = vmatpush1.bf16.msra.mxu0 0
        %819 = vmatprep.subr.bf16.mxu0 0
        %820 = vmatpush1.bf16.msra.mxu0 0
        %821 = vmatprep.subr.bf16.mxu0 0
        %822 = vmatpush1.bf16.msra.mxu0 0
        %823 = vmatprep.subr.bf16.mxu0 0
        %824 = vmatpush1.bf16.msra.mxu0 0
        %825 = vmatprep.subr.bf16.mxu0 0
        %826 = vmatpush1.bf16.msra.mxu0 0
        %827 = vmatprep.subr.bf16.mxu0 0
        %828 = vmatpush1.bf16.msra.mxu0 0
        %829 = vmatprep.subr.bf16.mxu0 0
        %830 = vmatpush1.bf16.msra.mxu0 0
        %831 = vmatprep.subr.bf16.mxu0 0
        %832 = vmatpush1.bf16.msra.mxu0 0
        %833 = vmatprep.subr.bf16.mxu0 0
        %834 = vmatpush1.bf16.msra.mxu0 0
        %835 = vmatprep.subr.bf16.mxu0 0
        %836 = vmatpush1.bf16.msra.mxu0 0
        %837 = vmatprep.subr.bf16.mxu0 0
        %838 = vmatpush1.bf16.msra.mxu0 0
        %839 = vmatprep.subr.bf16.mxu0 0
        %840 = vmatpush1.bf16.msra.mxu0 0
        %841 = vmatprep.subr.bf16.mxu0 0
        %842 = vmatpush1.bf16.msra.mxu0 0
        %843 = vmatprep.subr.bf16.mxu0 0
        %844 = vmatpush1.bf16.msra.mxu0 0
        %845 = vmatprep.mubr.bf16.mxu0 0
        %846 = vmatmul.mubr.bf16.gmra.mrb[0].mxu0 %v623
        %v847 = vpop.f32.mrb[0].mxu0
        %v848 = vadd.f32 0.0, %v847
        %v849 = vpop.f32.mrb[0].mxu0
        %v850 = vpop.f32.mrb[0].mxu0
        %v851 = vadd.f32 0.0, %v850
        %v852 = vpop.f32.mrb[0].mxu0
        %853 = vdwg.mxu0
        %856 = vrot.lane.b32.xlu0 %v739, 16
        %v857 = vpop.permute.xlu0 %856
        %858 = vrot.lane.b32.xlu0 %v740, 16
        %v859 = vpop.permute.xlu0 %858
        %v862 = vsel %vm560, %v848, %v857
        %v863 = vsel %vm560, %v851, %v859
        %v864 = vpack.c.bf16 %v863, %v862
        %v865 = vld [vmem:[%s5 + $0x58] sm:$0xff]
        %v866 = vld [vmem:[%s5 + $0x60] sm:$0xff]
        %v867 = vld [vmem:[%s5 + $0x68] sm:$0xff]
        %v868 = vld [vmem:[%s5 + $0x70] sm:$0xff]
        %v869 = vpack.c.bf16 %v866, %v865
        %v870 = vpack.c.bf16 %v868, %v867
        %v872 = vsel %vm441, %v864, 0
        %874 = vmatprep.subr.bf16.mxu0 0
        %875 = vmatpush1.bf16.msra.mxu0 %v869
        %876 = vmatprep.subr.bf16.mxu0 0
        %877 = vmatpush1.bf16.msra.mxu0 %v870
        %878 = vmatprep.subr.bf16.mxu0 0
        %879 = vmatpush1.bf16.msra.mxu0 0
        %880 = vmatprep.subr.bf16.mxu0 0
        %881 = vmatpush1.bf16.msra.mxu0 0
        %882 = vmatprep.subr.bf16.mxu0 0
        %883 = vmatpush1.bf16.msra.mxu0 0
        %884 = vmatprep.subr.bf16.mxu0 0
        %885 = vmatpush1.bf16.msra.mxu0 0
        %886 = vmatprep.subr.bf16.mxu0 0
        %887 = vmatpush1.bf16.msra.mxu0 0
        %888 = vmatprep.subr.bf16.mxu0 0
        %889 = vmatpush1.bf16.msra.mxu0 0
        %890 = vmatprep.subr.bf16.mxu0 0
        %891 = vmatpush1.bf16.msra.mxu0 0
        %892 = vmatprep.subr.bf16.mxu0 0
        %893 = vmatpush1.bf16.msra.mxu0 0
        %894 = vmatprep.subr.bf16.mxu0 0
        %895 = vmatpush1.bf16.msra.mxu0 0
        %896 = vmatprep.subr.bf16.mxu0 0
        %897 = vmatpush1.bf16.msra.mxu0 0
        %898 = vmatprep.subr.bf16.mxu0 0
        %899 = vmatpush1.bf16.msra.mxu0 0
        %900 = vmatprep.subr.bf16.mxu0 0
        %901 = vmatpush1.bf16.msra.mxu0 0
        %902 = vmatprep.subr.bf16.mxu0 0
        %903 = vmatpush1.bf16.msra.mxu0 0
        %904 = vmatprep.subr.bf16.mxu0 0
        %905 = vmatpush1.bf16.msra.mxu0 0
        %906 = vmatprep.mubr.bf16.mxu0 0
        %907 = vmatmul.mubr.bf16.gmra.mrb[0].mxu0 %v872
        %v908 = vpop.f32.mrb[0].mxu0
        %v909 = vadd.f32 0.0, %v908
        %v910 = vpop.f32.mrb[0].mxu0
        %v911 = vpop.f32.mrb[0].mxu0
        %v912 = vadd.f32 0.0, %v911
        %v913 = vpop.f32.mrb[0].mxu0
        %914 = vdwg.mxu0
        %v915 = vxor.u32 %v909, 2147483648
        %v916 = vxor.u32 %v912, 2147483648
        %v917 = vmul.f32 %v915, 1.442695
        %v918 = vpow.pop %v917
        %v919 = vmul.f32 %v916, 1.442695
        %v920 = vpow.pop %v919
        %v921 = vadd.f32 %v918, 1.0
        %v922 = vadd.f32 %v920, 1.0
        %v923 = vrcp.pop %v921
        %v924 = vmul.f32 1.0, %v923
        %v925 = vrcp.pop %v922
        %v926 = vmul.f32 1.0, %v925
        %v927 = vmul.f32 %v909, %v924
        %v928 = vmul.f32 %v912, %v926
        %v929 = vadd.f32 %v739, %v927
        %v930 = vadd.f32 %v740, %v928
        %v932 = vsel %vm560, %v929, 0
        %v935 = vsel %vm560, %v930, 0
        %937 = vmatprep.subr.mxu0 0.0
        %938 = vmatpush1.msra.mxu0 %v344
        %939 = vmatprep.subr.mxu0 0.0
        %940 = vmatpush1.msra.mxu0 %v345
        %941 = vmatprep.subr.mxu0 0.0
        %942 = vmatpush1.msra.mxu0 0.0
        %943 = vmatprep.subr.mxu0 0.0
        %944 = vmatpush1.msra.mxu0 0.0
        %945 = vmatprep.subr.mxu0 0.0
        %946 = vmatpush1.msra.mxu0 0.0
        %947 = vmatprep.subr.mxu0 0.0
        %948 = vmatpush1.msra.mxu0 0.0
        %949 = vmatprep.subr.mxu0 0.0
        %950 = vmatpush1.msra.mxu0 0.0
        %951 = vmatprep.subr.mxu0 0.0
        %952 = vmatpush1.msra.mxu0 0.0
        %953 = vmatprep.subr.mxu0 0.0
        %954 = vmatpush1.msra.mxu0 0.0
        %955 = vmatprep.subr.mxu0 0.0
        %956 = vmatpush1.msra.mxu0 0.0
        %957 = vmatprep.subr.mxu0 0.0
        %958 = vmatpush1.msra.mxu0 0.0
        %959 = vmatprep.subr.mxu0 0.0
        %960 = vmatpush1.msra.mxu0 0.0
        %961 = vmatprep.subr.mxu0 0.0
        %962 = vmatpush1.msra.mxu0 0.0
        %963 = vmatprep.subr.mxu0 0.0
        %964 = vmatpush1.msra.mxu0 0.0
        %965 = vmatprep.subr.mxu0 0.0
        %966 = vmatpush1.msra.mxu0 0.0
        %967 = vmatprep.subr.mxu0 0.0
        %968 = vmatpush1.msra.mxu0 0.0
        %969 = vmatprep.subr.mxu0 0.0
        %970 = vmatpush1.msra.mxu0 0.0
        %971 = vmatprep.subr.mxu0 0.0
        %972 = vmatpush1.msra.mxu0 0.0
        %973 = vmatprep.subr.mxu0 0.0
        %974 = vmatpush1.msra.mxu0 0.0
        %975 = vmatprep.subr.mxu0 0.0
        %976 = vmatpush1.msra.mxu0 0.0
        %977 = vmatprep.subr.mxu0 0.0
        %978 = vmatpush1.msra.mxu0 0.0
        %979 = vmatprep.subr.mxu0 0.0
        %980 = vmatpush1.msra.mxu0 0.0
        %981 = vmatprep.subr.mxu0 0.0
        %982 = vmatpush1.msra.mxu0 0.0
        %983 = vmatprep.subr.mxu0 0.0
        %984 = vmatpush1.msra.mxu0 0.0
        %985 = vmatprep.subr.mxu0 0.0
        %986 = vmatpush1.msra.mxu0 0.0
        %987 = vmatprep.subr.mxu0 0.0
        %988 = vmatpush1.msra.mxu0 0.0
        %989 = vmatprep.subr.mxu0 0.0
        %990 = vmatpush1.msra.mxu0 0.0
        %991 = vmatprep.subr.mxu0 0.0
        %992 = vmatpush1.msra.mxu0 0.0
        %993 = vmatprep.subr.mxu0 0.0
        %994 = vmatpush1.msra.mxu0 0.0
        %995 = vmatprep.subr.mxu0 0.0
        %996 = vmatpush1.msra.mxu0 0.0
        %997 = vmatprep.subr.mxu0 0.0
        %998 = vmatpush1.msra.mxu0 0.0
        %999 = vmatprep.subr.mxu0 0.0
        %1000 = vmatpush1.msra.mxu0 0.0
        %1001 = vmatprep.mubr.f32.mxu0 0.0
        %1002 = vmatmul.mubr.f32.gmra.mrb[0].mxu0 %v932
        %v1003 = vpop.f32.mrb[0].mxu0
        %v1004 = vadd.f32 0.0, %v1003
        %v1005 = vpop.f32.mrb[0].mxu0
        %1006 = vmatprep.mubr.f32.mxu0 0.0
        %1007 = vmatmul.mubr.f32.gmra.mrb[0].mxu0 %v935
        %v1008 = vpop.f32.mrb[0].mxu0
        %v1009 = vadd.f32 0.0, %v1008
        %v1010 = vpop.f32.mrb[0].mxu0
        %1011 = vdwg.mxu0
        %v1012 = vxor.u32 %v1004, 2147483648
        %v1013 = vxor.u32 %v1009, 2147483648
        %v1014 = vmul.f32 %v1012, 1.442695
        %v1015 = vpow.pop %v1014
        %v1016 = vmul.f32 %v1013, 1.442695
        %v1017 = vpow.pop %v1016
        %v1018 = vadd.f32 %v1015, 1.0
        %v1019 = vadd.f32 %v1017, 1.0
        %v1020 = vrcp.pop %v1018
        %v1021 = vmul.f32 1.0, %v1020
        %v1022 = vrcp.pop %v1019
        %v1023 = vmul.f32 1.0, %v1022
        %v1024 = vmul.f32 %v1004, %v1021
        %v1025 = vmul.f32 %v1009, %v1023
        %v1026 = vlaneseq
        %v1027 = vshrl.u32 %v1026, 7
        %v1028 = vsub.s32 0, %v1027
        %v1029 = vrot.slane %v348, %v1028
        %v1031 = vsel %vm560, %v1024, 0
        %v1034 = vsel %vm560, %v1025, 0
        %1036 = vmatprep.subr.mxu0 0.0
        %1037 = vmatpush1.msra.mxu0 %v346
        %1038 = vmatprep.subr.mxu0 0.0
        %1039 = vmatpush1.msra.mxu0 %v347
        %1040 = vmatprep.subr.mxu0 0.0
        %1041 = vmatpush1.msra.mxu0 0.0
        %1042 = vmatprep.subr.mxu0 0.0
        %1043 = vmatpush1.msra.mxu0 0.0
        %1044 = vmatprep.subr.mxu0 0.0
        %1045 = vmatpush1.msra.mxu0 0.0
        %1046 = vmatprep.subr.mxu0 0.0
        %1047 = vmatpush1.msra.mxu0 0.0
        %1048 = vmatprep.subr.mxu0 0.0
        %1049 = vmatpush1.msra.mxu0 0.0
        %1050 = vmatprep.subr.mxu0 0.0
        %1051 = vmatpush1.msra.mxu0 0.0
        %1052 = vmatprep.subr.mxu0 0.0
        %1053 = vmatpush1.msra.mxu0 0.0
        %1054 = vmatprep.subr.mxu0 0.0
        %1055 = vmatpush1.msra.mxu0 0.0
        %1056 = vmatprep.subr.mxu0 0.0
        %1057 = vmatpush1.msra.mxu0 0.0
        %1058 = vmatprep.subr.mxu0 0.0
        %1059 = vmatpush1.msra.mxu0 0.0
        %1060 = vmatprep.subr.mxu0 0.0
        %1061 = vmatpush1.msra.mxu0 0.0
        %1062 = vmatprep.subr.mxu0 0.0
        %1063 = vmatpush1.msra.mxu0 0.0
        %1064 = vmatprep.subr.mxu0 0.0
        %1065 = vmatpush1.msra.mxu0 0.0
        %1066 = vmatprep.subr.mxu0 0.0
        %1067 = vmatpush1.msra.mxu0 0.0
        %1068 = vmatprep.subr.mxu0 0.0
        %1069 = vmatpush1.msra.mxu0 0.0
        %1070 = vmatprep.subr.mxu0 0.0
        %1071 = vmatpush1.msra.mxu0 0.0
        %1072 = vmatprep.subr.mxu0 0.0
        %1073 = vmatpush1.msra.mxu0 0.0
        %1074 = vmatprep.subr.mxu0 0.0
        %1075 = vmatpush1.msra.mxu0 0.0
        %1076 = vmatprep.subr.mxu0 0.0
        %1077 = vmatpush1.msra.mxu0 0.0
        %1078 = vmatprep.subr.mxu0 0.0
        %1079 = vmatpush1.msra.mxu0 0.0
        %1080 = vmatprep.subr.mxu0 0.0
        %1081 = vmatpush1.msra.mxu0 0.0
        %1082 = vmatprep.subr.mxu0 0.0
        %1083 = vmatpush1.msra.mxu0 0.0
        %1084 = vmatprep.subr.mxu0 0.0
        %1085 = vmatpush1.msra.mxu0 0.0
        %1086 = vmatprep.subr.mxu0 0.0
        %1087 = vmatpush1.msra.mxu0 0.0
        %1088 = vmatprep.subr.mxu0 0.0
        %1089 = vmatpush1.msra.mxu0 0.0
        %1090 = vmatprep.subr.mxu0 0.0
        %1091 = vmatpush1.msra.mxu0 0.0
        %1092 = vmatprep.subr.mxu0 0.0
        %1093 = vmatpush1.msra.mxu0 0.0
        %1094 = vmatprep.subr.mxu0 0.0
        %1095 = vmatpush1.msra.mxu0 0.0
        %1096 = vmatprep.subr.mxu0 0.0
        %1097 = vmatpush1.msra.mxu0 0.0
        %1098 = vmatprep.subr.mxu0 0.0
        %1099 = vmatpush1.msra.mxu0 0.0
        %1100 = vmatprep.mubr.f32.mxu0 0.0
        %1101 = vmatmul.mubr.f32.gmra.mrb[0].mxu0 %v1031
        %v1102 = vpop.f32.mrb[0].mxu0
        %v1103 = vadd.f32 %v1029, %v1102
        %v1104 = vpop.f32.mrb[0].mxu0
        %1105 = vmatprep.mubr.f32.mxu0 0.0
        %1106 = vmatmul.mubr.f32.gmra.mrb[0].mxu0 %v1034
        %v1107 = vpop.f32.mrb[0].mxu0
        %v1108 = vadd.f32 %v1029, %v1107
        %v1109 = vpop.f32.mrb[0].mxu0
        %1110 = vdwg.mxu0
        %v1112 = vsel %vm560, %v558, 0
        %1114 = vmatprep.subr.mxu0 0.0
        %1115 = vmatpush1.msra.mxu0 %v1103
        %1116 = vmatprep.subr.mxu0 0.0
        %1117 = vmatpush1.msra.mxu0 %v1108
        %1118 = vmatprep.subr.mxu0 0.0
        %1119 = vmatpush1.msra.mxu0 0.0
        %1120 = vmatprep.subr.mxu0 0.0
        %1121 = vmatpush1.msra.mxu0 0.0
        %1122 = vmatprep.subr.mxu0 0.0
        %1123 = vmatpush1.msra.mxu0 0.0
        %1124 = vmatprep.subr.mxu0 0.0
        %1125 = vmatpush1.msra.mxu0 0.0
        %1126 = vmatprep.subr.mxu0 0.0
        %1127 = vmatpush1.msra.mxu0 0.0
        %1128 = vmatprep.subr.mxu0 0.0
        %1129 = vmatpush1.msra.mxu0 0.0
        %1130 = vmatprep.subr.mxu0 0.0
        %1131 = vmatpush1.msra.mxu0 0.0
        %1132 = vmatprep.subr.mxu0 0.0
        %1133 = vmatpush1.msra.mxu0 0.0
        %1134 = vmatprep.subr.mxu0 0.0
        %1135 = vmatpush1.msra.mxu0 0.0
        %1136 = vmatprep.subr.mxu0 0.0
        %1137 = vmatpush1.msra.mxu0 0.0
        %1138 = vmatprep.subr.mxu0 0.0
        %1139 = vmatpush1.msra.mxu0 0.0
        %1140 = vmatprep.subr.mxu0 0.0
        %1141 = vmatpush1.msra.mxu0 0.0
        %1142 = vmatprep.subr.mxu0 0.0
        %1143 = vmatpush1.msra.mxu0 0.0
        %1144 = vmatprep.subr.mxu0 0.0
        %1145 = vmatpush1.msra.mxu0 0.0
        %1146 = vmatprep.subr.mxu0 0.0
        %1147 = vmatpush1.msra.mxu0 0.0
        %1148 = vmatprep.subr.mxu0 0.0
        %1149 = vmatpush1.msra.mxu0 0.0
        %1150 = vmatprep.subr.mxu0 0.0
        %1151 = vmatpush1.msra.mxu0 0.0
        %1152 = vmatprep.subr.mxu0 0.0
        %1153 = vmatpush1.msra.mxu0 0.0
        %1154 = vmatprep.subr.mxu0 0.0
        %1155 = vmatpush1.msra.mxu0 0.0
        %1156 = vmatprep.subr.mxu0 0.0
        %1157 = vmatpush1.msra.mxu0 0.0
        %1158 = vmatprep.subr.mxu0 0.0
        %1159 = vmatpush1.msra.mxu0 0.0
        %1160 = vmatprep.subr.mxu0 0.0
        %1161 = vmatpush1.msra.mxu0 0.0
        %1162 = vmatprep.subr.mxu0 0.0
        %1163 = vmatpush1.msra.mxu0 0.0
        %1164 = vmatprep.subr.mxu0 0.0
        %1165 = vmatpush1.msra.mxu0 0.0
        %1166 = vmatprep.subr.mxu0 0.0
        %1167 = vmatpush1.msra.mxu0 0.0
        %1168 = vmatprep.subr.mxu0 0.0
        %1169 = vmatpush1.msra.mxu0 0.0
        %1170 = vmatprep.subr.mxu0 0.0
        %1171 = vmatpush1.msra.mxu0 0.0
        %1172 = vmatprep.subr.mxu0 0.0
        %1173 = vmatpush1.msra.mxu0 0.0
        %1174 = vmatprep.subr.mxu0 0.0
        %1175 = vmatpush1.msra.mxu0 0.0
        %1176 = vmatprep.subr.mxu0 0.0
        %1177 = vmatpush1.msra.mxu0 0.0
        %1178 = vmatprep.mubr.f32.mxu0 0.0
        %1179 = vmatmul.mubr.f32.gmra.mrb[0].mxu0 %v1112
        %v1180 = vpop.f32.mrb[0].mxu0
        %v1181 = vadd.f32 0.0, %v1180
        %v1182 = vpop.f32.mrb[0].mxu0
        %1183 = vdwg.mxu0
        %vm1184 = vcmask 123904
        %v1185 = vsel %vm1184, %v558, 0.0
        %1186 = vadd.xlane.f32.xlu0 %v1185
        %v1187 = vpop.xlane.xlu0 %1186
        %v1188 = vmax.f32 %v1187, 1.0
        %v1189 = vrcp.pop %v1188
        %v1190 = vmul.f32 %v1181, %v1189
        %1192 = vrot.lane.b32.xlu0 %v1190, 122
        %v1193 = vpop.permute.xlu0 %1192
        %1195 = vrot.lane.b32.xlu0 %v1190, 116
        %v1196 = vpop.permute.xlu0 %1195
        %1198 = vrot.lane.b32.xlu0 %v1190, 110
        %v1199 = vpop.permute.xlu0 %1198
        %1201 = vrot.lane.b32.xlu0 %v1190, 104
        %v1202 = vpop.permute.xlu0 %1201
        %1203 = vrot.lane.b32.xlu0 %v1190, 98
        %v1204 = vpop.permute.xlu0 %1203
        %v1205 = vcombine.low %v1190, %v1196
        %v1207 = vunpack.c.l.s4 1983009808
        %v1208 = vunpack.c.0.s8 %v1207
        %v1209 = vlaneseq
        %v1210 = vshrl.u32 %v1209, 7
        %v1211 = vsub.s32 %v1208, %v1210
        %v1212 = vrot.slane %v1205, %v1211
        %v1213 = vcombine.low %v1193, %v1199
        %v1215 = vunpack.c.l.s4 1983009808
        %v1216 = vunpack.c.0.s8 %v1215
        %v1217 = vlaneseq
        %v1218 = vshrl.u32 %v1217, 7
        %v1219 = vsub.s32 %v1216, %v1218
        %v1220 = vrot.slane %v1213, %v1219
        %v1223 = vcombine.low %v1212, %v1220
        %v1225 = vunpack.c.l.s4 1934713408
        %v1226 = vunpack.c.0.s8 %v1225
        %v1227 = vlaneseq
        %v1228 = vshrl.u32 %v1227, 7
        %v1229 = vsub.s32 %v1226, %v1228
        %v1230 = vrot.slane %v1223, %v1229
        %v1231 = vcombine.low %v1202, %v1204
        %v1233 = vunpack.c.l.s4 1934713408
        %v1234 = vunpack.c.0.s8 %v1233
        %v1235 = vlaneseq
        %v1236 = vshrl.u32 %v1235, 7
        %v1237 = vsub.s32 %v1234, %v1236
        %v1238 = vrot.slane %v1231, %v1237
        %v1239 = vcombine.low %v1230, %v1238
        %v1240 = vcombine.high %v1230, %v1238
        %1242 = vset.pattern.permute.xlu0 0
        %1243 = vperm.xlu0 %1242, %v1239
        %v1244 = vpop.permute.xlu0 %1243
        %1247 = vset.pattern.permute.xlu0 0
        %1248 = vperm.xlu0 %1247, %v1240
        %v1249 = vpop.permute.xlu0 %1248
        %v1251 = vlaneseq
        %v1252 = vshrl.u32 %v1251, 7
        %v1253 = vsub.s32 0, %v1252
        %v1254 = vrot.slane %v1239, %v1253
        %v1255 = vlaneseq
        %v1256 = vshrl.u32 %v1255, 7
        %v1257 = vsub.s32 0, %v1256
        %v1258 = vrot.slane %v1240, %v1257
        %v1259 = vmul.f32 %v1244, %v1254
        %v1260 = vmul.f32 %v1249, %v1258
        %1261 = vset.pattern.permute.xlu0 1
        %1262 = vperm.xlu0 %1261, %v1239
        %v1263 = vpop.permute.xlu0 %1262
        %1265 = vset.pattern.permute.xlu0 1
        %1266 = vperm.xlu0 %1265, %v1240
        %v1267 = vpop.permute.xlu0 %1266
        %v1269 = vlaneseq
        %v1270 = vshrl.u32 %v1269, 7
        %v1271 = vsub.s32 1, %v1270
        %v1272 = vrot.slane %v1239, %v1271
        %v1273 = vlaneseq
        %v1274 = vshrl.u32 %v1273, 7
        %v1275 = vsub.s32 1, %v1274
        %v1276 = vrot.slane %v1240, %v1275
        %v1277 = vmul.f32 %v1263, %v1272
        %v1278 = vmul.f32 %v1267, %v1276
        %v1279 = vadd.f32 %v1259, %v1277
        %v1280 = vadd.f32 %v1260, %v1278
        %1281 = vset.pattern.permute.xlu0 2
        %1282 = vperm.xlu0 %1281, %v1239
        %v1283 = vpop.permute.xlu0 %1282
        %1285 = vset.pattern.permute.xlu0 2
        %1286 = vperm.xlu0 %1285, %v1240
        %v1287 = vpop.permute.xlu0 %1286
        %v1289 = vlaneseq
        %v1290 = vshrl.u32 %v1289, 7
        %v1291 = vsub.s32 2, %v1290
        %v1292 = vrot.slane %v1239, %v1291
        %v1293 = vlaneseq
        %v1294 = vshrl.u32 %v1293, 7
        %v1295 = vsub.s32 2, %v1294
        %v1296 = vrot.slane %v1240, %v1295
        %v1297 = vmul.f32 %v1283, %v1292
        %v1298 = vmul.f32 %v1287, %v1296
        %v1299 = vadd.f32 %v1279, %v1297
        %v1300 = vadd.f32 %v1280, %v1298
        %1301 = vset.pattern.permute.xlu0 3
        %1302 = vperm.xlu0 %1301, %v1239
        %v1303 = vpop.permute.xlu0 %1302
        %1305 = vset.pattern.permute.xlu0 3
        %1306 = vperm.xlu0 %1305, %v1240
        %v1307 = vpop.permute.xlu0 %1306
        %v1309 = vlaneseq
        %v1310 = vshrl.u32 %v1309, 7
        %v1311 = vsub.s32 3, %v1310
        %v1312 = vrot.slane %v1239, %v1311
        %v1313 = vlaneseq
        %v1314 = vshrl.u32 %v1313, 7
        %v1315 = vsub.s32 3, %v1314
        %v1316 = vrot.slane %v1240, %v1315
        %v1317 = vmul.f32 %v1303, %v1312
        %v1318 = vmul.f32 %v1307, %v1316
        %v1319 = vadd.f32 %v1299, %v1317
        %v1320 = vadd.f32 %v1300, %v1318
        %1321 = vset.pattern.permute.xlu0 4
        %1322 = vperm.xlu0 %1321, %v1239
        %v1323 = vpop.permute.xlu0 %1322
        %1325 = vset.pattern.permute.xlu0 4
        %1326 = vperm.xlu0 %1325, %v1240
        %v1327 = vpop.permute.xlu0 %1326
        %v1329 = vlaneseq
        %v1330 = vshrl.u32 %v1329, 7
        %v1331 = vsub.s32 4, %v1330
        %v1332 = vrot.slane %v1239, %v1331
        %v1333 = vlaneseq
        %v1334 = vshrl.u32 %v1333, 7
        %v1335 = vsub.s32 4, %v1334
        %v1336 = vrot.slane %v1240, %v1335
        %v1337 = vmul.f32 %v1323, %v1332
        %v1338 = vmul.f32 %v1327, %v1336
        %v1339 = vadd.f32 %v1319, %v1337
        %v1340 = vadd.f32 %v1320, %v1338
        %1341 = vset.pattern.permute.xlu0 5
        %1342 = vperm.xlu0 %1341, %v1239
        %v1343 = vpop.permute.xlu0 %1342
        %1345 = vset.pattern.permute.xlu0 5
        %1346 = vperm.xlu0 %1345, %v1240
        %v1347 = vpop.permute.xlu0 %1346
        %v1349 = vlaneseq
        %v1350 = vshrl.u32 %v1349, 7
        %v1351 = vsub.s32 5, %v1350
        %v1352 = vrot.slane %v1239, %v1351
        %v1353 = vlaneseq
        %v1354 = vshrl.u32 %v1353, 7
        %v1355 = vsub.s32 5, %v1354
        %v1356 = vrot.slane %v1240, %v1355
        %v1357 = vmul.f32 %v1343, %v1352
        %v1358 = vmul.f32 %v1347, %v1356
        %v1359 = vadd.f32 %v1339, %v1357
        %v1360 = vadd.f32 %v1340, %v1358
        %v1362 = vunpack.c.l.s4 1983009808
        %v1363 = vunpack.c.0.s8 %v1362
        %v1364 = vlaneseq
        %v1365 = vshrl.u32 %v1364, 7
        %v1366 = vsub.s32 %v1363, %v1365
        %v1367 = vrot.slane %v1359, %v1366
        %v1368 = vcombine.high %v1359, 0.0
        %v1370 = vunpack.c.l.s4 1983009808
        %v1371 = vunpack.c.0.s8 %v1370
        %v1372 = vlaneseq
        %v1373 = vshrl.u32 %v1372, 7
        %v1374 = vsub.s32 %v1371, %v1373
        %v1375 = vrot.slane %v1360, %v1374
        %v1376 = vcombine.high %v1360, 0.0
        %v1377 = vcombine.low %v1367, %v1375
        %v1378 = vcombine.high %v1367, %v1375
        %v1380 = vunpack.c.l.s4 1934713408
        %v1381 = vunpack.c.0.s8 %v1380
        %v1382 = vlaneseq
        %v1383 = vshrl.u32 %v1382, 7
        %v1384 = vsub.s32 %v1381, %v1383
        %v1385 = vrot.slane %v1377, %v1384
        %v1387 = vunpack.c.l.s4 1934713408
        %v1388 = vunpack.c.0.s8 %v1387
        %v1389 = vlaneseq
        %v1390 = vshrl.u32 %v1389, 7
        %v1391 = vsub.s32 %v1388, %v1390
        %v1392 = vrot.slane %v1378, %v1391
        %v1393 = vcombine.low %v1368, %v1376
        %v1395 = vunpack.c.l.s4 1934713408
        %v1396 = vunpack.c.0.s8 %v1395
        %v1397 = vlaneseq
        %v1398 = vshrl.u32 %v1397, 7
        %v1399 = vsub.s32 %v1396, %v1398
        %v1400 = vrot.slane %v1393, %v1399
        %v1401 = vcombine.high %v1385, 0.0
        %v1402 = vcombine.high %v1392, 0.0
        %v1403 = vcombine.high %v1400, 0.0
        %1405 = vrot.lane.b32.xlu0 %v1401, 6
        %v1406 = vpop.permute.xlu0 %1405
        %1409 = vrot.lane.b32.xlu0 %v1392, 12
        %v1410 = vpop.permute.xlu0 %1409
        %1413 = vrot.lane.b32.xlu0 %v1402, 18
        %v1414 = vpop.permute.xlu0 %1413
        %1417 = vrot.lane.b32.xlu0 %v1400, 24
        %v1418 = vpop.permute.xlu0 %1417
        %1421 = vrot.lane.b32.xlu0 %v1403, 30
        %v1422 = vpop.permute.xlu0 %1421
        %vm1424 = vcmask 48128
        %v1425 = vsel %vm1424, %v1385, %v1406
        %vm1426 = vcmask 97280
        %v1427 = vsel %vm1426, %v1425, %v1410
        %vm1428 = vcmask 146432
        %v1429 = vsel %vm1428, %v1427, %v1414
        %vm1430 = vcmask 195584
        %v1431 = vsel %vm1430, %v1429, %v1418
        %vm1432 = vcmask 244736
        %v1433 = vsel %vm1432, %v1431, %v1422
        %vm1434 = vcmask 287744
        %1435 = vst.msk [vmem:[%s296] sm:$0x3] %vm1434, %v1433
        %s1436 = sand.u32 %s179, 1
        %s1437 = scalar_lea.sflag [#allocation3], %s1436
        %s1438 = sand.u32 %s179, 1
        %s1439 = smul.addr %s1438, 2
        %s1440 = scalar_lea.vmem [#allocation2], %s1439
        // Predicated region
        $region45: #{tpu_custom_call.1} parent=43 // pred_check
          %p1441 = pneg %p189
        $region46: #{tpu_custom_call.1} parent=43 // pred_check_branch
          %1443 = sbr.rel (%p1441) target = $region48
        $region47: #{tpu_custom_call.1} parent=43 // pred_region
          %s1445 = ssub.s32 32, 32
          %1446 = vsyncadd %s1437, %s1445
          %s1447 = smul.addr %s20, 32
          %s1448 = scalar_lea.hbm %s6, %s1447
          %s1450 = sshll.u32 %s1440, 4
          %s1451 = int_to_ptr.vmem [resolvable:$true] %s1450
          %1453 = dma.vmem_to_hbm [thread:$0]  %s1451, 32, %s1448, %s1437
        $region48: #{tpu_custom_call.1} parent=43 // pred_fallthru
          _
      $region44: #{tpu_custom_call.1} parent=5 // pred_fallthru
        _
      %p1454 = scmp.le.s32.totalorder 2, %s15
      // Predicated region
      $region49: #{tpu_custom_call.1} parent=5 // pred_check
        %p1455 = pneg %p1454
      $region50: #{tpu_custom_call.1} parent=5 // pred_check_branch
        %1457 = sbr.rel (%p1455) target = $region52
      $region51: #{tpu_custom_call.1} parent=5 // pred_region
        %s1458 = ssub.s32 %s15, 2
        // Predicated region
        $region53: #{tpu_custom_call.1} parent=51 // pred_check
          %p1459 = pneg %p195
        $region54: #{tpu_custom_call.1} parent=51 // pred_check_branch
          %1461 = sbr.rel (%p1459) target = $region56
        $region55: #{tpu_custom_call.1} parent=51 // pred_region
          %s1462 = sand.u32 %s180, 1
          %s1463 = scalar_lea.sflag [#allocation3], %s1462
          %s1464 = sand.u32 %s180, 1
          %s1465 = smul.addr %s1464, 2
          %s1466 = scalar_lea.vmem [#allocation2], %s1465
          %1467 = dma.done %s1463, 32
        $region56: #{tpu_custom_call.1} parent=51 // pred_fallthru
          _
      $region52: #{tpu_custom_call.1} parent=5 // pred_fallthru
        _
    $region6: #{tpu_custom_call.1} parent=1 // loop_footer
      %s19 = sadd.s32 1, %s15
    $region7: #{tpu_custom_call.1} parent=1 // loop_footer_branch
      %14 = sbr.rel target = $region3
    $region8: #{tpu_custom_call.1} parent=1 // loop_exit
      _
    %1468 = vsyncpa [#allocation3], 1
    %s1469 = scalar_lea.sflag [#allocation3], 1
    %1470 = vsyncpa %s1469, 1

</llo_original>
